<compile_context>
chip_gen: v6e
topology: v6e:2x2x1
jax: 0.10.0
libtpu: 0.0.40
codegen_flags: <defaults>
</compile_context>

<pallas_src>
import functools
import math

import jax
import jax.numpy as jnp
import numpy as np
from jax.experimental import pallas as pl
from jax.experimental.pallas import tpu as pltpu


def _layer_norm(x, gamma, beta, eps=1e-5):
    """PyTorch-style LayerNorm over the last axis (biased variance), f32."""
    mu = jnp.mean(x, axis=-1, keepdims=True)
    xc = x - mu
    var = jnp.mean(xc * xc, axis=-1, keepdims=True)
    return xc * jax.lax.rsqrt(var + eps) * gamma + beta


def _encoder_layer_kernel(valid_len_ref,                      # SMEM scalar prefetch
                          x_ref,
                          wq_ref, bq_ref, wk_ref, bk_ref, wv_ref, bv_ref,
                          wo_ref, bo_ref, g1_ref, be1_ref,
                          w1_ref, b1_ref, w2_ref, b2_ref, g2_ref, be2_ref,
                          o_ref, *, n_heads, d_k, d_v):
    """One batch element per grid step.

    valid_len_ref: (batch,) int32 in SMEM -> number of un-padded key positions
    x_ref:         (seq, f) f32 encoder input tile
    w*_ref:        pre-transposed weights in bf16; b*: (1, out) f32 biases
    g*/be*:        LayerNorm gamma / beta, (1, f) f32
    o_ref:         (seq, f) f32 encoder output tile
    """
    b = pl.program_id(0)
    x = x_ref[...]                                   # (seq, f) f32
    seq, f = x.shape
    x_bf = x.astype(jnp.bfloat16)

    # --- QKV projections (one big MXU matmul each, bf16 in / f32 acc) -----
    q = jnp.dot(x_bf, wq_ref[...], preferred_element_type=jnp.float32) + bq_ref[...]
    k = jnp.dot(x_bf, wk_ref[...], preferred_element_type=jnp.float32) + bk_ref[...]
    v = jnp.dot(x_bf, wv_ref[...], preferred_element_type=jnp.float32) + bv_ref[...]

    # --- Key-pad mask rebuilt in-kernel from the scalar-prefetched length --
    valid = valid_len_ref[b]                                       # SMEM scalar
    key_idx = jax.lax.broadcasted_iota(jnp.int32, (1, seq), 1)      # (1, seq)
    masked = jnp.broadcast_to(key_idx >= valid, (seq, seq))         # hoisted once

    inv_sqrt_dk = jnp.float32(1.0 / math.sqrt(d_k))
    neg_big = jnp.float32(-1e9)

    # --- Per-head attention; fold ctx_h straight into the output proj -----
    attn_acc = jnp.zeros((seq, f), jnp.float32)
    for h in range(n_heads):                          # n_heads is small & static
        qh = q[:, h * d_k:(h + 1) * d_k].astype(jnp.bfloat16)      # (seq, d_k)
        kh = k[:, h * d_k:(h + 1) * d_k].astype(jnp.bfloat16)      # (seq, d_k)
        vh = v[:, h * d_v:(h + 1) * d_v].astype(jnp.bfloat16)      # (seq, d_v)
        # scores = qh @ kh^T / sqrt(d_k) -> (seq, seq); contract last dims
        s = jax.lax.dot_general(qh, kh, (((1,), (1,)), ((), ())),
                                preferred_element_type=jnp.float32) * inv_sqrt_dk
        s = jnp.where(masked, neg_big, s)             # masked_fill_(mask, -1e9)
        s_max = jnp.max(s, axis=-1, keepdims=True)
        e = jnp.exp(s - s_max)
        p = e * pl.reciprocal(jnp.sum(e, axis=-1, keepdims=True), approx=True)
        ctx_h = jnp.dot(p.astype(jnp.bfloat16), vh,
                        preferred_element_type=jnp.float32)        # (seq, d_v)
        wo_h = wo_ref[h * d_v:(h + 1) * d_v, :]                    # (d_v, f) bf16
        attn_acc = attn_acc + jnp.dot(ctx_h.astype(jnp.bfloat16), wo_h,
                                      preferred_element_type=jnp.float32)
    attn_out = attn_acc + bo_ref[...]
    h1 = _layer_norm(attn_out + x, g1_ref[...], be1_ref[...])      # (seq, f) f32

    # --- Position-wise feed forward (kernel_size=1 convs == Linear) --------
    ff = jnp.dot(h1.astype(jnp.bfloat16), w1_ref[...],
                 preferred_element_type=jnp.float32) + b1_ref[...]
    ff = jnp.maximum(ff, 0.0)                                      # ReLU (f32)
    ff2 = jnp.dot(ff.astype(jnp.bfloat16), w2_ref[...],
                  preferred_element_type=jnp.float32) + b2_ref[...]
    o_ref[...] = _layer_norm(ff2 + h1, g2_ref[...], be2_ref[...]).astype(o_ref.dtype)


@functools.partial(jax.jit, static_argnames=("n_heads", "d_k", "d_v"))
def encoder_layer(enc_inputs, valid_len, params, *, n_heads, d_k, d_v):
    """Fused Pallas implementation of EncoderLayer.forward.

    The pad mask is built in-kernel from `valid_len` (as get_attn_pad_mask
    would); an arbitrary dense (B,S,S) mask would have to be passed as an
    int8 input instead.
    """
    # TODO(synk): the PyTorch forward's .to(self.device) calls are framework
    # glue (device placement) with no kernel equivalent.
    batch, seq, f = enc_inputs.shape

    x = enc_inputs.astype(jnp.float32)
    vl = valid_len.astype(jnp.int32)

    bf = jnp.bfloat16
    f32 = jnp.float32
    # glue: pre-transpose + cast so every in-kernel matmul is row-major bf16 x @ W.
    wq = params["wq"].T.astype(bf); bq = params["bq"].reshape(1, -1).astype(f32)
    wk = params["wk"].T.astype(bf); bk = params["bk"].reshape(1, -1).astype(f32)
    wv = params["wv"].T.astype(bf); bv = params["bv"].reshape(1, -1).astype(f32)
    wo = params["wo"].T.astype(bf); bo = params["bo"].reshape(1, -1).astype(f32)
    w1 = params["w1"].T.astype(bf); b1 = params["b1"].reshape(1, -1).astype(f32)
    w2 = params["w2"].T.astype(bf); b2 = params["b2"].reshape(1, -1).astype(f32)
    g1 = params["ln1_g"].reshape(1, -1).astype(f32)
    be1 = params["ln1_b"].reshape(1, -1).astype(f32)
    g2 = params["ln2_g"].reshape(1, -1).astype(f32)
    be2 = params["ln2_b"].reshape(1, -1).astype(f32)

    def const2(a):  # batch-invariant full-array 2-D spec (fetched once)
        return pl.BlockSpec(a.shape, lambda b, vl: (0, 0))

    kernel = functools.partial(_encoder_layer_kernel,
                               n_heads=n_heads, d_k=d_k, d_v=d_v)

    grid_spec = pltpu.PrefetchScalarGridSpec(
        num_scalar_prefetch=1,                 # valid_len -> SMEM
        grid=(batch,),
        in_specs=[
            pl.BlockSpec((None, seq, f), lambda b, vl: (b, 0, 0)),   # x
            const2(wq), const2(bq), const2(wk), const2(bk), const2(wv), const2(bv),
            const2(wo), const2(bo), const2(g1), const2(be1),
            const2(w1), const2(b1), const2(w2), const2(b2), const2(g2), const2(be2),
        ],
        out_specs=pl.BlockSpec((None, seq, f), lambda b, vl: (b, 0, 0)),
    )

    out = pl.pallas_call(
        kernel,
        out_shape=jax.ShapeDtypeStruct((batch, seq, f), jnp.float32),
        grid_spec=grid_spec,
        compiler_params=pltpu.CompilerParams(
            dimension_semantics=("parallel",),
            vmem_limit_bytes=32 * 1024 * 1024),   # safe on v5e/v6e/v7x
    )(vl, x, wq, bq, wk, bk, wv, bv, wo, bo, g1, be1,
      w1, b1, w2, b2, g2, be2)
    return out


def init_params(key, f_size, n_heads, d_k, d_v, d_ff):
    """Synthetic parameters matching the PyTorch module's shapes."""
    ks = jax.random.split(key, 12)

    def u(k, shape, fan_in):
        b = 1.0 / math.sqrt(fan_in)
        return jax.random.uniform(k, shape, jnp.float32, -b, b)

    return dict(
        wq=u(ks[0], (n_heads * d_k, f_size), f_size),   # nn.Linear(f, nh*dk)
        bq=u(ks[1], (n_heads * d_k,), f_size),
        wk=u(ks[2], (n_heads * d_k, f_size), f_size),
        bk=u(ks[3], (n_heads * d_k,), f_size),
        wv=u(ks[4], (n_heads * d_v, f_size), f_size),
        bv=u(ks[5], (n_heads * d_v,), f_size),
        wo=u(ks[6], (f_size, n_heads * d_v), n_heads * d_v),  # nn.Linear(nh*dv, f)
        bo=u(ks[7], (f_size,), n_heads * d_v),
        w1=u(ks[8], (d_ff, f_size), f_size),            # Conv1d(f, d_ff, 1)
        b1=u(ks[9], (d_ff,), f_size),
        w2=u(ks[10], (f_size, d_ff), d_ff),             # Conv1d(d_ff, f, 1)
        b2=u(ks[11], (f_size,), d_ff),
        ln1_g=jnp.ones((f_size,), jnp.float32),         # nn.LayerNorm(f)
        ln1_b=jnp.zeros((f_size,), jnp.float32),
        ln2_g=jnp.ones((f_size,), jnp.float32),
        ln2_b=jnp.zeros((f_size,), jnp.float32),
    )


def encoder_layer_ref(enc_inputs, valid_len, params, *, n_heads, d_k, d_v):
    """Pure-JAX f32 reference mirroring the PyTorch forward (mask built as
    get_attn_pad_mask would from valid_len)."""
    batch, seq, f = enc_inputs.shape
    x = enc_inputs.astype(jnp.float32)
    key_pad = jnp.arange(seq)[None, :] >= valid_len[:, None]          # (B, S)
    mask = jnp.broadcast_to(key_pad[:, None, :], (batch, seq, seq))
    q = x @ params["wq"].T + params["bq"]
    k = x @ params["wk"].T + params["bk"]
    v = x @ params["wv"].T + params["bv"]
    q = q.reshape(batch, seq, n_heads, d_k).transpose(0, 2, 1, 3)
    k = k.reshape(batch, seq, n_heads, d_k).transpose(0, 2, 1, 3)
    v = v.reshape(batch, seq, n_heads, d_v).transpose(0, 2, 1, 3)
    scores = jnp.einsum("bhqd,bhkd->bhqk", q, k) / math.sqrt(d_k)
    scores = jnp.where(mask[:, None, :, :], jnp.float32(-1e9), scores)
    attn = jax.nn.softmax(scores, axis=-1)
    ctx = jnp.einsum("bhqk,bhkd->bhqd", attn, v)
    ctx = ctx.transpose(0, 2, 1, 3).reshape(batch, seq, n_heads * d_v)
    attn_out = ctx @ params["wo"].T + params["bo"]
    h1 = _layer_norm(attn_out + x, params["ln1_g"], params["ln1_b"])
    ff = jnp.maximum(h1 @ params["w1"].T + params["b1"], 0.0)
    ff2 = ff @ params["w2"].T + params["b2"]
    return _layer_norm(ff2 + h1, params["ln2_g"], params["ln2_b"])


if __name__ == "__main__":
    batch, seq, f_size = 2, 8, 32
    n_heads, d_k, d_v, d_ff = 2, 16, 16, 64

    key = jax.random.PRNGKey(0)
    k_x, k_p = jax.random.split(key)
    enc_inputs = jax.random.normal(k_x, (batch, seq, f_size), jnp.float32)

    # Per-batch valid (un-padded) key length; key positions >= valid_len are
    # masked, broadcast over queries, as produced by get_attn_pad_mask.
    valid_len = jnp.array([seq, seq - 2], dtype=jnp.int32)

    params = init_params(k_p, f_size, n_heads, d_k, d_v, d_ff)

    out = jax.block_until_ready(
        encoder_layer(enc_inputs, valid_len, params,
                      n_heads=n_heads, d_k=d_k, d_v=d_v))
    ref = jax.block_until_ready(
        encoder_layer_ref(enc_inputs, valid_len, params,
                          n_heads=n_heads, d_k=d_k, d_v=d_v))

    assert out.shape == (batch, seq, f_size), out.shape
    # Tolerance loosened vs. the pure-f32 reference: matmul operands are bf16
    # on the MXU (f32 accumulate) and the softmax denominator uses the EUP
    # approximate reciprocal.
    np.testing.assert_allclose(np.asarray(out), np.asarray(ref),
                               rtol=2e-2, atol=2e-2)
    print("KERNEL_OK")
</pallas_src>

<mosaic_0001>
module attributes {stable_mosaic.version = 11 : i64} {
  func.func @_encoder_layer_kernel(%arg0: i32, %arg1: memref<2xi32, #tpu.memory_space<smem>>, %arg2: memref<1x8x32xf32, #tpu.memory_space<vmem>>, %arg3: memref<32x32xbf16, #tpu.memory_space<vmem>>, %arg4: memref<1x32xf32, #tpu.memory_space<vmem>>, %arg5: memref<32x32xbf16, #tpu.memory_space<vmem>>, %arg6: memref<1x32xf32, #tpu.memory_space<vmem>>, %arg7: memref<32x32xbf16, #tpu.memory_space<vmem>>, %arg8: memref<1x32xf32, #tpu.memory_space<vmem>>, %arg9: memref<32x32xbf16, #tpu.memory_space<vmem>>, %arg10: memref<1x32xf32, #tpu.memory_space<vmem>>, %arg11: memref<1x32xf32, #tpu.memory_space<vmem>>, %arg12: memref<1x32xf32, #tpu.memory_space<vmem>>, %arg13: memref<32x64xbf16, #tpu.memory_space<vmem>>, %arg14: memref<1x64xf32, #tpu.memory_space<vmem>>, %arg15: memref<64x32xbf16, #tpu.memory_space<vmem>>, %arg16: memref<1x32xf32, #tpu.memory_space<vmem>>, %arg17: memref<1x32xf32, #tpu.memory_space<vmem>>, %arg18: memref<1x32xf32, #tpu.memory_space<vmem>>, %arg19: memref<1x8x32xf32, #tpu.memory_space<vmem>>) attributes {dimension_semantics = [#tpu.dimension_semantics<parallel>], iteration_bounds = array<i64: 2>, scalar_prefetch = 1 : i64, scratch_operands = 0 : i64, tpu.core_type = #tpu.core_type<tc>, window_params = [{transform_indices = @transform_0, window_bounds = array<i64: 1, 8, 32>}, {pipeline_mode = #tpu.pipeline_mode<synchronous>, transform_indices = @transform_1, window_bounds = array<i64: 32, 32>}, {pipeline_mode = #tpu.pipeline_mode<synchronous>, transform_indices = @transform_2, window_bounds = array<i64: 1, 32>}, {pipeline_mode = #tpu.pipeline_mode<synchronous>, transform_indices = @transform_3, window_bounds = array<i64: 32, 32>}, {pipeline_mode = #tpu.pipeline_mode<synchronous>, transform_indices = @transform_4, window_bounds = array<i64: 1, 32>}, {pipeline_mode = #tpu.pipeline_mode<synchronous>, transform_indices = @transform_5, window_bounds = array<i64: 32, 32>}, {pipeline_mode = #tpu.pipeline_mode<synchronous>, transform_indices = @transform_6, window_bounds = array<i64: 1, 32>}, {pipeline_mode = #tpu.pipeline_mode<synchronous>, transform_indices = @transform_7, window_bounds = array<i64: 32, 32>}, {pipeline_mode = #tpu.pipeline_mode<synchronous>, transform_indices = @transform_8, window_bounds = array<i64: 1, 32>}, {pipeline_mode = #tpu.pipeline_mode<synchronous>, transform_indices = @transform_9, window_bounds = array<i64: 1, 32>}, {pipeline_mode = #tpu.pipeline_mode<synchronous>, transform_indices = @transform_10, window_bounds = array<i64: 1, 32>}, {pipeline_mode = #tpu.pipeline_mode<synchronous>, transform_indices = @transform_11, window_bounds = array<i64: 32, 64>}, {pipeline_mode = #tpu.pipeline_mode<synchronous>, transform_indices = @transform_12, window_bounds = array<i64: 1, 64>}, {pipeline_mode = #tpu.pipeline_mode<synchronous>, transform_indices = @transform_13, window_bounds = array<i64: 64, 32>}, {pipeline_mode = #tpu.pipeline_mode<synchronous>, transform_indices = @transform_14, window_bounds = array<i64: 1, 32>}, {pipeline_mode = #tpu.pipeline_mode<synchronous>, transform_indices = @transform_15, window_bounds = array<i64: 1, 32>}, {pipeline_mode = #tpu.pipeline_mode<synchronous>, transform_indices = @transform_16, window_bounds = array<i64: 1, 32>}, {transform_indices = @transform_17, window_bounds = array<i64: 1, 8, 32>}]} {
    %c0 = arith.constant 0 : index
    %c0_0 = arith.constant 0 : index
    %c0_1 = arith.constant 0 : index
    %0 = vector.load %arg2[%c0, %c0_0, %c0_1] : memref<1x8x32xf32, #tpu.memory_space<vmem>>, vector<1x8x32xf32>
    %1 = vector.shape_cast %0 : vector<1x8x32xf32> to vector<8x32xf32>
    %2 = arith.truncf %1 : vector<8x32xf32> to vector<8x32xbf16>
    %c0_2 = arith.constant 0 : index
    %c0_3 = arith.constant 0 : index
    %3 = vector.load %arg3[%c0_2, %c0_3] : memref<32x32xbf16, #tpu.memory_space<vmem>>, vector<32x32xbf16>
    %cst = arith.constant dense<0.000000e+00> : vector<8x32xf32>
    %4 = tpu.matmul %2, %3, %cst {dimension_numbers = #tpu.dot_dimension_numbers<[1], [0], [0], [1], [0, 0, 1, 1], [], []>} : vector<8x32xbf16>, vector<32x32xbf16>, vector<8x32xf32> -> vector<8x32xf32>
    %c0_4 = arith.constant 0 : index
    %c0_5 = arith.constant 0 : index
    %5 = vector.load %arg4[%c0_4, %c0_5] : memref<1x32xf32, #tpu.memory_space<vmem>>, vector<1x32xf32>
    %6 = vector.broadcast %5 : vector<1x32xf32> to vector<8x32xf32>
    %7 = arith.addf %4, %6 : vector<8x32xf32>
    %c0_6 = arith.constant 0 : index
    %c0_7 = arith.constant 0 : index
    %8 = vector.load %arg5[%c0_6, %c0_7] : memref<32x32xbf16, #tpu.memory_space<vmem>>, vector<32x32xbf16>
    %cst_8 = arith.constant dense<0.000000e+00> : vector<8x32xf32>
    %9 = tpu.matmul %2, %8, %cst_8 {dimension_numbers = #tpu.dot_dimension_numbers<[1], [0], [0], [1], [0, 0, 1, 1], [], []>} : vector<8x32xbf16>, vector<32x32xbf16>, vector<8x32xf32> -> vector<8x32xf32>
    %c0_9 = arith.constant 0 : index
    %c0_10 = arith.constant 0 : index
    %10 = vector.load %arg6[%c0_9, %c0_10] : memref<1x32xf32, #tpu.memory_space<vmem>>, vector<1x32xf32>
    %11 = vector.broadcast %10 : vector<1x32xf32> to vector<8x32xf32>
    %12 = arith.addf %9, %11 : vector<8x32xf32>
    %c0_11 = arith.constant 0 : index
    %c0_12 = arith.constant 0 : index
    %13 = vector.load %arg7[%c0_11, %c0_12] : memref<32x32xbf16, #tpu.memory_space<vmem>>, vector<32x32xbf16>
    %cst_13 = arith.constant dense<0.000000e+00> : vector<8x32xf32>
    %14 = tpu.matmul %2, %13, %cst_13 {dimension_numbers = #tpu.dot_dimension_numbers<[1], [0], [0], [1], [0, 0, 1, 1], [], []>} : vector<8x32xbf16>, vector<32x32xbf16>, vector<8x32xf32> -> vector<8x32xf32>
    %c0_14 = arith.constant 0 : index
    %c0_15 = arith.constant 0 : index
    %15 = vector.load %arg8[%c0_14, %c0_15] : memref<1x32xf32, #tpu.memory_space<vmem>>, vector<1x32xf32>
    %16 = vector.broadcast %15 : vector<1x32xf32> to vector<8x32xf32>
    %17 = arith.addf %14, %16 : vector<8x32xf32>
    %18 = arith.index_cast %arg0 : i32 to index
    %19 = memref.load %arg1[%18] : memref<2xi32, #tpu.memory_space<smem>>
    %20 = tpu.iota {dimensions = array<i32: 1>} : vector<1x8xi32>
    %21 = vector.broadcast %19 : i32 to vector<1x8xi32>
    %22 = arith.cmpi sge, %20, %21 : vector<1x8xi32>
    %23 = vector.shape_cast %22 : vector<1x8xi1> to vector<1x8xi1>
    %24 = vector.broadcast %23 : vector<1x8xi1> to vector<8x8xi1>
    %cst_16 = arith.constant 0.000000e+00 : f32
    %25 = vector.broadcast %cst_16 : f32 to vector<8x32xf32>
    %26 = vector.extract_strided_slice %7 {offsets = [0, 0], sizes = [8, 16], strides = [1, 1]} : vector<8x32xf32> to vector<8x16xf32>
    %27 = arith.truncf %26 : vector<8x16xf32> to vector<8x16xbf16>
    %28 = vector.extract_strided_slice %12 {offsets = [0, 0], sizes = [8, 16], strides = [1, 1]} : vector<8x32xf32> to vector<8x16xf32>
    %29 = arith.truncf %28 : vector<8x16xf32> to vector<8x16xbf16>
    %30 = vector.extract_strided_slice %17 {offsets = [0, 0], sizes = [8, 16], strides = [1, 1]} : vector<8x32xf32> to vector<8x16xf32>
    %31 = arith.truncf %30 : vector<8x16xf32> to vector<8x16xbf16>
    %cst_17 = arith.constant dense<0.000000e+00> : vector<8x8xf32>
    %32 = tpu.matmul %27, %29, %cst_17 {dimension_numbers = #tpu.dot_dimension_numbers<[1], [1], [0], [0], [0, 0, 1, 0], [], []>} : vector<8x16xbf16>, vector<8x16xbf16>, vector<8x8xf32> -> vector<8x8xf32>
    %cst_18 = arith.constant 2.500000e-01 : f32
    %33 = vector.broadcast %cst_18 : f32 to vector<8x8xf32>
    %34 = arith.mulf %32, %33 : vector<8x8xf32>
    %cst_19 = arith.constant -1.000000e+09 : f32
    %35 = vector.broadcast %cst_19 : f32 to vector<8x8xf32>
    %36 = arith.select %24, %35, %34 : vector<8x8xi1>, vector<8x8xf32>
    %cst_20 = arith.constant dense<0xFF800000> : vector<8xf32>
    %37 = vector.multi_reduction <maximumf>, %36, %cst_20 [1] : vector<8x8xf32> to vector<8xf32>
    %38 = vector.shape_cast %37 : vector<8xf32> to vector<8x1xf32>
    %39 = vector.broadcast %38 : vector<8x1xf32> to vector<8x8xf32>
    %40 = arith.subf %36, %39 : vector<8x8xf32>
    %41 = math.exp %40 : vector<8x8xf32>
    %cst_21 = arith.constant dense<0.000000e+00> : vector<8xf32>
    %42 = vector.multi_reduction <add>, %41, %cst_21 [1] : vector<8x8xf32> to vector<8xf32>
    %43 = vector.shape_cast %42 : vector<8xf32> to vector<8x1xf32>
    %44 = tpu.reciprocal %43 {approx = true} : vector<8x1xf32> -> vector<8x1xf32>
    %45 = vector.broadcast %44 : vector<8x1xf32> to vector<8x8xf32>
    %46 = arith.mulf %41, %45 : vector<8x8xf32>
    %47 = arith.truncf %46 : vector<8x8xf32> to vector<8x8xbf16>
    %cst_22 = arith.constant dense<0.000000e+00> : vector<8x16xf32>
    %48 = tpu.matmul %47, %31, %cst_22 {dimension_numbers = #tpu.dot_dimension_numbers<[1], [0], [0], [1], [0, 0, 1, 1], [], []>} : vector<8x8xbf16>, vector<8x16xbf16>, vector<8x16xf32> -> vector<8x16xf32>
    %c0_23 = arith.constant 0 : index
    %c0_24 = arith.constant 0 : index
    %49 = vector.load %arg9[%c0_23, %c0_24] : memref<32x32xbf16, #tpu.memory_space<vmem>>, vector<16x32xbf16>
    %50 = arith.truncf %48 : vector<8x16xf32> to vector<8x16xbf16>
    %cst_25 = arith.constant dense<0.000000e+00> : vector<8x32xf32>
    %51 = tpu.matmul %50, %49, %cst_25 {dimension_numbers = #tpu.dot_dimension_numbers<[1], [0], [0], [1], [0, 0, 1, 1], [], []>} : vector<8x16xbf16>, vector<16x32xbf16>, vector<8x32xf32> -> vector<8x32xf32>
    %52 = arith.addf %25, %51 : vector<8x32xf32>
    %53 = vector.extract_strided_slice %7 {offsets = [0, 16], sizes = [8, 16], strides = [1, 1]} : vector<8x32xf32> to vector<8x16xf32>
    %54 = arith.truncf %53 : vector<8x16xf32> to vector<8x16xbf16>
    %55 = vector.extract_strided_slice %12 {offsets = [0, 16], sizes = [8, 16], strides = [1, 1]} : vector<8x32xf32> to vector<8x16xf32>
    %56 = arith.truncf %55 : vector<8x16xf32> to vector<8x16xbf16>
    %57 = vector.extract_strided_slice %17 {offsets = [0, 16], sizes = [8, 16], strides = [1, 1]} : vector<8x32xf32> to vector<8x16xf32>
    %58 = arith.truncf %57 : vector<8x16xf32> to vector<8x16xbf16>
    %cst_26 = arith.constant dense<0.000000e+00> : vector<8x8xf32>
    %59 = tpu.matmul %54, %56, %cst_26 {dimension_numbers = #tpu.dot_dimension_numbers<[1], [1], [0], [0], [0, 0, 1, 0], [], []>} : vector<8x16xbf16>, vector<8x16xbf16>, vector<8x8xf32> -> vector<8x8xf32>
    %cst_27 = arith.constant 2.500000e-01 : f32
    %60 = vector.broadcast %cst_27 : f32 to vector<8x8xf32>
    %61 = arith.mulf %59, %60 : vector<8x8xf32>
    %cst_28 = arith.constant -1.000000e+09 : f32
    %62 = vector.broadcast %cst_28 : f32 to vector<8x8xf32>
    %63 = arith.select %24, %62, %61 : vector<8x8xi1>, vector<8x8xf32>
    %cst_29 = arith.constant dense<0xFF800000> : vector<8xf32>
    %64 = vector.multi_reduction <maximumf>, %63, %cst_29 [1] : vector<8x8xf32> to vector<8xf32>
    %65 = vector.shape_cast %64 : vector<8xf32> to vector<8x1xf32>
    %66 = vector.broadcast %65 : vector<8x1xf32> to vector<8x8xf32>
    %67 = arith.subf %63, %66 : vector<8x8xf32>
    %68 = math.exp %67 : vector<8x8xf32>
    %cst_30 = arith.constant dense<0.000000e+00> : vector<8xf32>
    %69 = vector.multi_reduction <add>, %68, %cst_30 [1] : vector<8x8xf32> to vector<8xf32>
    %70 = vector.shape_cast %69 : vector<8xf32> to vector<8x1xf32>
    %71 = tpu.reciprocal %70 {approx = true} : vector<8x1xf32> -> vector<8x1xf32>
    %72 = vector.broadcast %71 : vector<8x1xf32> to vector<8x8xf32>
    %73 = arith.mulf %68, %72 : vector<8x8xf32>
    %74 = arith.truncf %73 : vector<8x8xf32> to vector<8x8xbf16>
    %cst_31 = arith.constant dense<0.000000e+00> : vector<8x16xf32>
    %75 = tpu.matmul %74, %58, %cst_31 {dimension_numbers = #tpu.dot_dimension_numbers<[1], [0], [0], [1], [0, 0, 1, 1], [], []>} : vector<8x8xbf16>, vector<8x16xbf16>, vector<8x16xf32> -> vector<8x16xf32>
    %c16 = arith.constant 16 : index
    %c0_32 = arith.constant 0 : index
    %76 = vector.load %arg9[%c16, %c0_32] : memref<32x32xbf16, #tpu.memory_space<vmem>>, vector<16x32xbf16>
    %77 = arith.truncf %75 : vector<8x16xf32> to vector<8x16xbf16>
    %cst_33 = arith.constant dense<0.000000e+00> : vector<8x32xf32>
    %78 = tpu.matmul %77, %76, %cst_33 {dimension_numbers = #tpu.dot_dimension_numbers<[1], [0], [0], [1], [0, 0, 1, 1], [], []>} : vector<8x16xbf16>, vector<16x32xbf16>, vector<8x32xf32> -> vector<8x32xf32>
    %79 = arith.addf %52, %78 : vector<8x32xf32>
    %c0_34 = arith.constant 0 : index
    %c0_35 = arith.constant 0 : index
    %80 = vector.load %arg10[%c0_34, %c0_35] : memref<1x32xf32, #tpu.memory_space<vmem>>, vector<1x32xf32>
    %81 = vector.broadcast %80 : vector<1x32xf32> to vector<8x32xf32>
    %82 = arith.addf %79, %81 : vector<8x32xf32>
    %83 = arith.addf %82, %1 : vector<8x32xf32>
    %c0_36 = arith.constant 0 : index
    %c0_37 = arith.constant 0 : index
    %84 = vector.load %arg11[%c0_36, %c0_37] : memref<1x32xf32, #tpu.memory_space<vmem>>, vector<1x32xf32>
    %c0_38 = arith.constant 0 : index
    %c0_39 = arith.constant 0 : index
    %85 = vector.load %arg12[%c0_38, %c0_39] : memref<1x32xf32, #tpu.memory_space<vmem>>, vector<1x32xf32>
    %cst_40 = arith.constant dense<0.000000e+00> : vector<8xf32>
    %86 = vector.multi_reduction <add>, %83, %cst_40 [1] : vector<8x32xf32> to vector<8xf32>
    %87 = vector.shape_cast %86 : vector<8xf32> to vector<8x1xf32>
    %cst_41 = arith.constant 3.200000e+01 : f32
    %88 = vector.broadcast %cst_41 : f32 to vector<8x1xf32>
    %89 = arith.divf %87, %88 : vector<8x1xf32>
    %90 = vector.broadcast %89 : vector<8x1xf32> to vector<8x32xf32>
    %91 = arith.subf %83, %90 : vector<8x32xf32>
    %92 = arith.mulf %91, %91 : vector<8x32xf32>
    %cst_42 = arith.constant dense<0.000000e+00> : vector<8xf32>
    %93 = vector.multi_reduction <add>, %92, %cst_42 [1] : vector<8x32xf32> to vector<8xf32>
    %94 = vector.shape_cast %93 : vector<8xf32> to vector<8x1xf32>
    %cst_43 = arith.constant 3.200000e+01 : f32
    %95 = vector.broadcast %cst_43 : f32 to vector<8x1xf32>
    %96 = arith.divf %94, %95 : vector<8x1xf32>
    %cst_44 = arith.constant 9.99999974E-6 : f32
    %97 = vector.broadcast %cst_44 : f32 to vector<8x1xf32>
    %98 = arith.addf %96, %97 : vector<8x1xf32>
    %99 = math.rsqrt %98 : vector<8x1xf32>
    %100 = vector.broadcast %99 : vector<8x1xf32> to vector<8x32xf32>
    %101 = arith.mulf %91, %100 : vector<8x32xf32>
    %102 = vector.broadcast %84 : vector<1x32xf32> to vector<8x32xf32>
    %103 = arith.mulf %101, %102 : vector<8x32xf32>
    %104 = vector.broadcast %85 : vector<1x32xf32> to vector<8x32xf32>
    %105 = arith.addf %103, %104 : vector<8x32xf32>
    %106 = arith.truncf %105 : vector<8x32xf32> to vector<8x32xbf16>
    %c0_45 = arith.constant 0 : index
    %c0_46 = arith.constant 0 : index
    %107 = vector.load %arg13[%c0_45, %c0_46] : memref<32x64xbf16, #tpu.memory_space<vmem>>, vector<32x64xbf16>
    %cst_47 = arith.constant dense<0.000000e+00> : vector<8x64xf32>
    %108 = tpu.matmul %106, %107, %cst_47 {dimension_numbers = #tpu.dot_dimension_numbers<[1], [0], [0], [1], [0, 0, 1, 1], [], []>} : vector<8x32xbf16>, vector<32x64xbf16>, vector<8x64xf32> -> vector<8x64xf32>
    %c0_48 = arith.constant 0 : index
    %c0_49 = arith.constant 0 : index
    %109 = vector.load %arg14[%c0_48, %c0_49] : memref<1x64xf32, #tpu.memory_space<vmem>>, vector<1x64xf32>
    %110 = vector.broadcast %109 : vector<1x64xf32> to vector<8x64xf32>
    %111 = arith.addf %108, %110 : vector<8x64xf32>
    %cst_50 = arith.constant 0.000000e+00 : f32
    %112 = vector.broadcast %cst_50 : f32 to vector<8x64xf32>
    %113 = arith.maximumf %111, %112 : vector<8x64xf32>
    %114 = arith.truncf %113 : vector<8x64xf32> to vector<8x64xbf16>
    %c0_51 = arith.constant 0 : index
    %c0_52 = arith.constant 0 : index
    %115 = vector.load %arg15[%c0_51, %c0_52] : memref<64x32xbf16, #tpu.memory_space<vmem>>, vector<64x32xbf16>
    %cst_53 = arith.constant dense<0.000000e+00> : vector<8x32xf32>
    %116 = tpu.matmul %114, %115, %cst_53 {dimension_numbers = #tpu.dot_dimension_numbers<[1], [0], [0], [1], [0, 0, 1, 1], [], []>} : vector<8x64xbf16>, vector<64x32xbf16>, vector<8x32xf32> -> vector<8x32xf32>
    %c0_54 = arith.constant 0 : index
    %c0_55 = arith.constant 0 : index
    %117 = vector.load %arg16[%c0_54, %c0_55] : memref<1x32xf32, #tpu.memory_space<vmem>>, vector<1x32xf32>
    %118 = vector.broadcast %117 : vector<1x32xf32> to vector<8x32xf32>
    %119 = arith.addf %116, %118 : vector<8x32xf32>
    %120 = arith.addf %119, %105 : vector<8x32xf32>
    %c0_56 = arith.constant 0 : index
    %c0_57 = arith.constant 0 : index
    %121 = vector.load %arg17[%c0_56, %c0_57] : memref<1x32xf32, #tpu.memory_space<vmem>>, vector<1x32xf32>
    %c0_58 = arith.constant 0 : index
    %c0_59 = arith.constant 0 : index
    %122 = vector.load %arg18[%c0_58, %c0_59] : memref<1x32xf32, #tpu.memory_space<vmem>>, vector<1x32xf32>
    %cst_60 = arith.constant dense<0.000000e+00> : vector<8xf32>
    %123 = vector.multi_reduction <add>, %120, %cst_60 [1] : vector<8x32xf32> to vector<8xf32>
    %124 = vector.shape_cast %123 : vector<8xf32> to vector<8x1xf32>
    %cst_61 = arith.constant 3.200000e+01 : f32
    %125 = vector.broadcast %cst_61 : f32 to vector<8x1xf32>
    %126 = arith.divf %124, %125 : vector<8x1xf32>
    %127 = vector.broadcast %126 : vector<8x1xf32> to vector<8x32xf32>
    %128 = arith.subf %120, %127 : vector<8x32xf32>
    %129 = arith.mulf %128, %128 : vector<8x32xf32>
    %cst_62 = arith.constant dense<0.000000e+00> : vector<8xf32>
    %130 = vector.multi_reduction <add>, %129, %cst_62 [1] : vector<8x32xf32> to vector<8xf32>
    %131 = vector.shape_cast %130 : vector<8xf32> to vector<8x1xf32>
    %cst_63 = arith.constant 3.200000e+01 : f32
    %132 = vector.broadcast %cst_63 : f32 to vector<8x1xf32>
    %133 = arith.divf %131, %132 : vector<8x1xf32>
    %cst_64 = arith.constant 9.99999974E-6 : f32
    %134 = vector.broadcast %cst_64 : f32 to vector<8x1xf32>
    %135 = arith.addf %133, %134 : vector<8x1xf32>
    %136 = math.rsqrt %135 : vector<8x1xf32>
    %137 = vector.broadcast %136 : vector<8x1xf32> to vector<8x32xf32>
    %138 = arith.mulf %128, %137 : vector<8x32xf32>
    %139 = vector.broadcast %121 : vector<1x32xf32> to vector<8x32xf32>
    %140 = arith.mulf %138, %139 : vector<8x32xf32>
    %141 = vector.broadcast %122 : vector<1x32xf32> to vector<8x32xf32>
    %142 = arith.addf %140, %141 : vector<8x32xf32>
    %c0_65 = arith.constant 0 : index
    %c0_66 = arith.constant 0 : index
    %c0_67 = arith.constant 0 : index
    %143 = vector.load %arg19[%c0_65, %c0_66, %c0_67] : memref<1x8x32xf32, #tpu.memory_space<vmem>>, vector<1x8x32xf32>
    %144 = vector.shape_cast %143 : vector<1x8x32xf32> to vector<8x32xf32>
    %145 = vector.shape_cast %142 : vector<8x32xf32> to vector<1x8x32xf32>
    tpu.vector_store %arg19[%c0_65, %c0_66, %c0_67], %145 {strides = array<i32>} : memref<1x8x32xf32, #tpu.memory_space<vmem>>, vector<1x8x32xf32>,
    return
  }
  func.func @transform_0(%arg0: i32, %arg1: memref<2xi32, #tpu.memory_space<smem>>) -> (i32, i32, i32) {
    %c0_i32 = arith.constant 0 : i32
    %c0_i32_0 = arith.constant 0 : i32
    %c0_i32_1 = arith.constant 0 : i32
    return %arg0, %c0_i32, %c0_i32_0 : i32, i32, i32
  }
  func.func @transform_1(%arg0: i32, %arg1: memref<2xi32, #tpu.memory_space<smem>>) -> (i32, i32) {
    %c0_i32 = arith.constant 0 : i32
    %c0_i32_0 = arith.constant 0 : i32
    %c0_i32_1 = arith.constant 0 : i32
    return %c0_i32, %c0_i32_0 : i32, i32
  }
  func.func @transform_2(%arg0: i32, %arg1: memref<2xi32, #tpu.memory_space<smem>>) -> (i32, i32) {
    %c0_i32 = arith.constant 0 : i32
    %c0_i32_0 = arith.constant 0 : i32
    %c0_i32_1 = arith.constant 0 : i32
    return %c0_i32, %c0_i32_0 : i32, i32
  }
  func.func @transform_3(%arg0: i32, %arg1: memref<2xi32, #tpu.memory_space<smem>>) -> (i32, i32) {
    %c0_i32 = arith.constant 0 : i32
    %c0_i32_0 = arith.constant 0 : i32
    %c0_i32_1 = arith.constant 0 : i32
    return %c0_i32, %c0_i32_0 : i32, i32
  }
  func.func @transform_4(%arg0: i32, %arg1: memref<2xi32, #tpu.memory_space<smem>>) -> (i32, i32) {
    %c0_i32 = arith.constant 0 : i32
    %c0_i32_0 = arith.constant 0 : i32
    %c0_i32_1 = arith.constant 0 : i32
    return %c0_i32, %c0_i32_0 : i32, i32
  }
  func.func @transform_5(%arg0: i32, %arg1: memref<2xi32, #tpu.memory_space<smem>>) -> (i32, i32) {
    %c0_i32 = arith.constant 0 : i32
    %c0_i32_0 = arith.constant 0 : i32
    %c0_i32_1 = arith.constant 0 : i32
    return %c0_i32, %c0_i32_0 : i32, i32
  }
  func.func @transform_6(%arg0: i32, %arg1: memref<2xi32, #tpu.memory_space<smem>>) -> (i32, i32) {
    %c0_i32 = arith.constant 0 : i32
    %c0_i32_0 = arith.constant 0 : i32
    %c0_i32_1 = arith.constant 0 : i32
    return %c0_i32, %c0_i32_0 : i32, i32
  }
  func.func @transform_7(%arg0: i32, %arg1: memref<2xi32, #tpu.memory_space<smem>>) -> (i32, i32) {
    %c0_i32 = arith.constant 0 : i32
    %c0_i32_0 = arith.constant 0 : i32
    %c0_i32_1 = arith.constant 0 : i32
    return %c0_i32, %c0_i32_0 : i32, i32
  }
  func.func @transform_8(%arg0: i32, %arg1: memref<2xi32, #tpu.memory_space<smem>>) -> (i32, i32) {
    %c0_i32 = arith.constant 0 : i32
    %c0_i32_0 = arith.constant 0 : i32
    %c0_i32_1 = arith.constant 0 : i32
    return %c0_i32, %c0_i32_0 : i32, i32
  }
  func.func @transform_9(%arg0: i32, %arg1: memref<2xi32, #tpu.memory_space<smem>>) -> (i32, i32) {
    %c0_i32 = arith.constant 0 : i32
    %c0_i32_0 = arith.constant 0 : i32
    %c0_i32_1 = arith.constant 0 : i32
    return %c0_i32, %c0_i32_0 : i32, i32
  }
  func.func @transform_10(%arg0: i32, %arg1: memref<2xi32, #tpu.memory_space<smem>>) -> (i32, i32) {
    %c0_i32 = arith.constant 0 : i32
    %c0_i32_0 = arith.constant 0 : i32
    %c0_i32_1 = arith.constant 0 : i32
    return %c0_i32, %c0_i32_0 : i32, i32
  }
  func.func @transform_11(%arg0: i32, %arg1: memref<2xi32, #tpu.memory_space<smem>>) -> (i32, i32) {
    %c0_i32 = arith.constant 0 : i32
    %c0_i32_0 = arith.constant 0 : i32
    %c0_i32_1 = arith.constant 0 : i32
    return %c0_i32, %c0_i32_0 : i32, i32
  }
  func.func @transform_12(%arg0: i32, %arg1: memref<2xi32, #tpu.memory_space<smem>>) -> (i32, i32) {
    %c0_i32 = arith.constant 0 : i32
    %c0_i32_0 = arith.constant 0 : i32
    %c0_i32_1 = arith.constant 0 : i32
    return %c0_i32, %c0_i32_0 : i32, i32
  }
  func.func @transform_13(%arg0: i32, %arg1: memref<2xi32, #tpu.memory_space<smem>>) -> (i32, i32) {
    %c0_i32 = arith.constant 0 : i32
    %c0_i32_0 = arith.constant 0 : i32
    %c0_i32_1 = arith.constant 0 : i32
    return %c0_i32, %c0_i32_0 : i32, i32
  }
  func.func @transform_14(%arg0: i32, %arg1: memref<2xi32, #tpu.memory_space<smem>>) -> (i32, i32) {
    %c0_i32 = arith.constant 0 : i32
    %c0_i32_0 = arith.constant 0 : i32
    %c0_i32_1 = arith.constant 0 : i32
    return %c0_i32, %c0_i32_0 : i32, i32
  }
  func.func @transform_15(%arg0: i32, %arg1: memref<2xi32, #tpu.memory_space<smem>>) -> (i32, i32) {
    %c0_i32 = arith.constant 0 : i32
    %c0_i32_0 = arith.constant 0 : i32
    %c0_i32_1 = arith.constant 0 : i32
    return %c0_i32, %c0_i32_0 : i32, i32
  }
  func.func @transform_16(%arg0: i32, %arg1: memref<2xi32, #tpu.memory_space<smem>>) -> (i32, i32) {
    %c0_i32 = arith.constant 0 : i32
    %c0_i32_0 = arith.constant 0 : i32
    %c0_i32_1 = arith.constant 0 : i32
    return %c0_i32, %c0_i32_0 : i32, i32
  }
  func.func @transform_17(%arg0: i32, %arg1: memref<2xi32, #tpu.memory_space<smem>>) -> (i32, i32, i32) {
    %c0_i32 = arith.constant 0 : i32
    %c0_i32_0 = arith.constant 0 : i32
    %c0_i32_1 = arith.constant 0 : i32
    return %arg0, %c0_i32, %c0_i32_0 : i32, i32, i32
  }
}

</mosaic_0001>

<llo_original>
// kernel: encoder_layer.1
$region0: #{encoder_layer.1}
  #allocation0 [shape = 'u32[]', space=smem, size = 0x4, offset = 0x4, fixed_abs, tag = 'smem constant byte address 0x4 - core index']
  #allocation1 [shape = 'u32[144,128]{1,0:T(1,128)}', space=vmem, size = 0x12000, scoped, tag = 'internal scratch']
  #allocation2 [shape = 's32[1]{0}', space=sflag, size = 0x4, scoped, tag = 'scoped memory for encoder_layer.1']
  #allocation3 [shape = 'u8[512]{0}', space=smem, size = 0x200, scoped, tag = 'prefetched SMEM operand 0']
  %s0 = inlined_call_operand.vmem [shape: s32[2], index: 0, kind: input, shape index: {}]
  %s1 = inlined_call_operand.vmem [shape: f32[2,8,32], index: 1, kind: input, shape index: {}]
  %s2 = inlined_call_operand.vmem [shape: bf16[32,32], index: 2, kind: input, shape index: {}]
  %s3 = inlined_call_operand.vmem [shape: f32[1,32], index: 3, kind: input, shape index: {}]
  %s4 = inlined_call_operand.vmem [shape: bf16[32,32], index: 4, kind: input, shape index: {}]
  %s5 = inlined_call_operand.vmem [shape: f32[1,32], index: 5, kind: input, shape index: {}]
  %s6 = inlined_call_operand.vmem [shape: bf16[32,32], index: 6, kind: input, shape index: {}]
  %s7 = inlined_call_operand.vmem [shape: f32[1,32], index: 7, kind: input, shape index: {}]
  %s8 = inlined_call_operand.vmem [shape: bf16[32,32], index: 8, kind: input, shape index: {}]
  %s9 = inlined_call_operand.vmem [shape: f32[1,32], index: 9, kind: input, shape index: {}]
  %s10 = inlined_call_operand.vmem [shape: f32[1,32], index: 10, kind: input, shape index: {}]
  %s11 = inlined_call_operand.vmem [shape: f32[1,32], index: 11, kind: input, shape index: {}]
  %s12 = inlined_call_operand.vmem [shape: bf16[32,64], index: 12, kind: input, shape index: {}]
  %s13 = inlined_call_operand.vmem [shape: f32[1,64], index: 13, kind: input, shape index: {}]
  %s14 = inlined_call_operand.vmem [shape: bf16[64,32], index: 14, kind: input, shape index: {}]
  %s15 = inlined_call_operand.vmem [shape: f32[1,32], index: 15, kind: input, shape index: {}]
  %s16 = inlined_call_operand.vmem [shape: f32[1,32], index: 16, kind: input, shape index: {}]
  %s17 = inlined_call_operand.vmem [shape: f32[1,32], index: 17, kind: input, shape index: {}]
  %s18 = inlined_call_operand.hbm [shape: f32[2,8,32], index: 18, kind: output, shape index: {}]
  %s19 = sld [smem:[#allocation0]]
  $region101: #{encoder_layer.1} parent=0
    _
  %s21 = ssub.s32 1, %s19
  %s22 = scalar_select 0, %s21, %s19
  %s23 = sshll.u32 %s0, 4
  %s24 = int_to_ptr.vmem [resolvable:$true] %s23
  %26 = dma.vmem_to_smem %s24, 16, [#allocation3], [#allocation2]
  %27 = dma.done [#allocation2], 16
  %28 = sfence
  $region1: #{encoder_layer.1} parent=0
    #allocation4 [shape = 'u8[8192]{0}', space=vmem, size = 0x2000, scoped, tag = 'output window, operand 0']
    #allocation5 [shape = 's32[2]{0}', space=sflag, size = 0x8, scoped, tag = 'scoped memory for encoder_layer.1']
    %29 = vsyncpa [#allocation5], 0
    %s30 = scalar_lea.sflag [#allocation5], 1
    %31 = vsyncpa %s30, 0
    loop: start=0, step=1, limit=4
    $region2: #{encoder_layer.1} parent=1 // loop_pre_header
      _
    $region3: #{encoder_layer.1} parent=1 // loop_header
      %s33 = sphi 0, %s37
      %p34 = scmp.ge.s32.totalorder %s33, 4
      %s43 = sphi 0, %s45
      %s46 = sphi 0, %s43
      %s47 = sphi 0, %s46
      %s63 = sphi 0, %s47
      %s67 = sphi 0, %s67
      %s69 = sphi 0, %s67
      %s70 = sphi 0, %s69
      %s84 = sphi 0, %s70
      %s88 = sphi 0, %s88
      %s90 = sphi 0, %s88
      %s91 = sphi 0, %s90
      %s105 = sphi 0, %s91
      %s109 = sphi 0, %s109
      %s111 = sphi 0, %s109
      %s112 = sphi 0, %s111
      %s126 = sphi 0, %s112
      %s130 = sphi 0, %s130
      %s132 = sphi 0, %s130
      %s133 = sphi 0, %s132
      %s147 = sphi 0, %s133
      %s151 = sphi 0, %s151
      %s153 = sphi 0, %s151
      %s154 = sphi 0, %s153
      %s168 = sphi 0, %s154
      %s172 = sphi 0, %s172
      %s174 = sphi 0, %s172
      %s175 = sphi 0, %s174
      %s189 = sphi 0, %s175
      %s193 = sphi 0, %s193
      %s195 = sphi 0, %s193
      %s196 = sphi 0, %s195
      %s210 = sphi 0, %s196
      %s214 = sphi 0, %s214
      %s216 = sphi 0, %s214
      %s217 = sphi 0, %s216
      %s231 = sphi 0, %s217
      %s235 = sphi 0, %s235
      %s237 = sphi 0, %s235
      %s238 = sphi 0, %s237
      %s252 = sphi 0, %s238
      %s256 = sphi 0, %s256
      %s258 = sphi 0, %s256
      %s259 = sphi 0, %s258
      %s273 = sphi 0, %s259
      %s277 = sphi 0, %s277
      %s279 = sphi 0, %s277
      %s280 = sphi 0, %s279
      %s294 = sphi 0, %s280
      %s298 = sphi 0, %s298
      %s300 = sphi 0, %s298
      %s301 = sphi 0, %s300
      %s315 = sphi 0, %s301
      %s319 = sphi 0, %s319
      %s321 = sphi 0, %s319
      %s322 = sphi 0, %s321
      %s336 = sphi 0, %s322
      %s340 = sphi 0, %s340
      %s342 = sphi 0, %s340
      %s343 = sphi 0, %s342
      %s357 = sphi 0, %s343
      %s361 = sphi 0, %s361
      %s363 = sphi 0, %s361
      %s364 = sphi 0, %s363
      %s378 = sphi 0, %s364
      %s382 = sphi 0, %s382
      %s384 = sphi 0, %s382
      %s385 = sphi 0, %s384
      %s399 = sphi 0, %s385
      %s405 = sphi 0, %s407
      %s408 = sphi 0, %s405
      %s409 = sphi 0, %s408
      %s425 = sphi 0, %s409
    $region4: #{encoder_layer.1} parent=1 // loop_header_branch
      %36 = sbr.rel (%p34) target = $region8
    $region5: #{encoder_layer.1} parent=1 // loop_body
      %s38 = ssub.s32 %s33, 1
      %s39 = ssub.s32 %s33, 2
      %s40 = sadd.s32 %s33, 1
      %s41 = ssub.s32 %s33, %s40
      %p42 = scmp.eq.s32.totalorder %s41, 0
      %s44 = sadd.s32 %s43, 1
      %s45 = scalar_select %p42, %s43, %s44
      %p48 = pneg %p42
      %p49 = scmp.eq.s32.totalorder %s33, 1
      %p50 = por %p48, %p49
      %p51 = scmp.ne.s32.totalorder %s43, %s46
      %p52 = scmp.eq.s32.totalorder %s33, 0
      %p53 = por %p51, %p52
      %p54 = scmp.ne.s32.totalorder %s43, %s46
      %p55 = scmp.eq.s32.totalorder %s38, 1
      %p56 = por %p54, %p55
      %p57 = scmp.ne.s32.totalorder %s46, %s47
      %p58 = scmp.eq.s32.totalorder %s38, 0
      %p59 = por %p57, %p58
      %p60 = scmp.ne.s32.totalorder %s46, %s47
      %p61 = scmp.eq.s32.totalorder %s39, 1
      %p62 = por %p60, %p61
      %p64 = scmp.ne.s32.totalorder %s47, %s63
      %p65 = scmp.eq.s32.totalorder %s39, 0
      %p66 = por %p64, %p65
      %s68 = sadd.s32 %s67, 1
      %p71 = scmp.eq.s32.totalorder %s33, 1
      %p72 = scmp.ne.s32.totalorder %s67, %s69
      %p73 = scmp.eq.s32.totalorder %s33, 0
      %p74 = por %p72, %p73
      %p75 = scmp.ne.s32.totalorder %s67, %s69
      %p76 = scmp.eq.s32.totalorder %s38, 1
      %p77 = por %p75, %p76
      %p78 = scmp.ne.s32.totalorder %s69, %s70
      %p79 = scmp.eq.s32.totalorder %s38, 0
      %p80 = por %p78, %p79
      %p81 = scmp.ne.s32.totalorder %s69, %s70
      %p82 = scmp.eq.s32.totalorder %s39, 1
      %p83 = por %p81, %p82
      %p85 = scmp.ne.s32.totalorder %s70, %s84
      %p86 = scmp.eq.s32.totalorder %s39, 0
      %p87 = por %p85, %p86
      %s89 = sadd.s32 %s88, 1
      %p92 = scmp.eq.s32.totalorder %s33, 1
      %p93 = scmp.ne.s32.totalorder %s88, %s90
      %p94 = scmp.eq.s32.totalorder %s33, 0
      %p95 = por %p93, %p94
      %p96 = scmp.ne.s32.totalorder %s88, %s90
      %p97 = scmp.eq.s32.totalorder %s38, 1
      %p98 = por %p96, %p97
      %p99 = scmp.ne.s32.totalorder %s90, %s91
      %p100 = scmp.eq.s32.totalorder %s38, 0
      %p101 = por %p99, %p100
      %p102 = scmp.ne.s32.totalorder %s90, %s91
      %p103 = scmp.eq.s32.totalorder %s39, 1
      %p104 = por %p102, %p103
      %p106 = scmp.ne.s32.totalorder %s91, %s105
      %p107 = scmp.eq.s32.totalorder %s39, 0
      %p108 = por %p106, %p107
      %s110 = sadd.s32 %s109, 1
      %p113 = scmp.eq.s32.totalorder %s33, 1
      %p114 = scmp.ne.s32.totalorder %s109, %s111
      %p115 = scmp.eq.s32.totalorder %s33, 0
      %p116 = por %p114, %p115
      %p117 = scmp.ne.s32.totalorder %s109, %s111
      %p118 = scmp.eq.s32.totalorder %s38, 1
      %p119 = por %p117, %p118
      %p120 = scmp.ne.s32.totalorder %s111, %s112
      %p121 = scmp.eq.s32.totalorder %s38, 0
      %p122 = por %p120, %p121
      %p123 = scmp.ne.s32.totalorder %s111, %s112
      %p124 = scmp.eq.s32.totalorder %s39, 1
      %p125 = por %p123, %p124
      %p127 = scmp.ne.s32.totalorder %s112, %s126
      %p128 = scmp.eq.s32.totalorder %s39, 0
      %p129 = por %p127, %p128
      %s131 = sadd.s32 %s130, 1
      %p134 = scmp.eq.s32.totalorder %s33, 1
      %p135 = scmp.ne.s32.totalorder %s130, %s132
      %p136 = scmp.eq.s32.totalorder %s33, 0
      %p137 = por %p135, %p136
      %p138 = scmp.ne.s32.totalorder %s130, %s132
      %p139 = scmp.eq.s32.totalorder %s38, 1
      %p140 = por %p138, %p139
      %p141 = scmp.ne.s32.totalorder %s132, %s133
      %p142 = scmp.eq.s32.totalorder %s38, 0
      %p143 = por %p141, %p142
      %p144 = scmp.ne.s32.totalorder %s132, %s133
      %p145 = scmp.eq.s32.totalorder %s39, 1
      %p146 = por %p144, %p145
      %p148 = scmp.ne.s32.totalorder %s133, %s147
      %p149 = scmp.eq.s32.totalorder %s39, 0
      %p150 = por %p148, %p149
      %s152 = sadd.s32 %s151, 1
      %p155 = scmp.eq.s32.totalorder %s33, 1
      %p156 = scmp.ne.s32.totalorder %s151, %s153
      %p157 = scmp.eq.s32.totalorder %s33, 0
      %p158 = por %p156, %p157
      %p159 = scmp.ne.s32.totalorder %s151, %s153
      %p160 = scmp.eq.s32.totalorder %s38, 1
      %p161 = por %p159, %p160
      %p162 = scmp.ne.s32.totalorder %s153, %s154
      %p163 = scmp.eq.s32.totalorder %s38, 0
      %p164 = por %p162, %p163
      %p165 = scmp.ne.s32.totalorder %s153, %s154
      %p166 = scmp.eq.s32.totalorder %s39, 1
      %p167 = por %p165, %p166
      %p169 = scmp.ne.s32.totalorder %s154, %s168
      %p170 = scmp.eq.s32.totalorder %s39, 0
      %p171 = por %p169, %p170
      %s173 = sadd.s32 %s172, 1
      %p176 = scmp.eq.s32.totalorder %s33, 1
      %p177 = scmp.ne.s32.totalorder %s172, %s174
      %p178 = scmp.eq.s32.totalorder %s33, 0
      %p179 = por %p177, %p178
      %p180 = scmp.ne.s32.totalorder %s172, %s174
      %p181 = scmp.eq.s32.totalorder %s38, 1
      %p182 = por %p180, %p181
      %p183 = scmp.ne.s32.totalorder %s174, %s175
      %p184 = scmp.eq.s32.totalorder %s38, 0
      %p185 = por %p183, %p184
      %p186 = scmp.ne.s32.totalorder %s174, %s175
      %p187 = scmp.eq.s32.totalorder %s39, 1
      %p188 = por %p186, %p187
      %p190 = scmp.ne.s32.totalorder %s175, %s189
      %p191 = scmp.eq.s32.totalorder %s39, 0
      %p192 = por %p190, %p191
      %s194 = sadd.s32 %s193, 1
      %p197 = scmp.eq.s32.totalorder %s33, 1
      %p198 = scmp.ne.s32.totalorder %s193, %s195
      %p199 = scmp.eq.s32.totalorder %s33, 0
      %p200 = por %p198, %p199
      %p201 = scmp.ne.s32.totalorder %s193, %s195
      %p202 = scmp.eq.s32.totalorder %s38, 1
      %p203 = por %p201, %p202
      %p204 = scmp.ne.s32.totalorder %s195, %s196
      %p205 = scmp.eq.s32.totalorder %s38, 0
      %p206 = por %p204, %p205
      %p207 = scmp.ne.s32.totalorder %s195, %s196
      %p208 = scmp.eq.s32.totalorder %s39, 1
      %p209 = por %p207, %p208
      %p211 = scmp.ne.s32.totalorder %s196, %s210
      %p212 = scmp.eq.s32.totalorder %s39, 0
      %p213 = por %p211, %p212
      %s215 = sadd.s32 %s214, 1
      %p218 = scmp.eq.s32.totalorder %s33, 1
      %p219 = scmp.ne.s32.totalorder %s214, %s216
      %p220 = scmp.eq.s32.totalorder %s33, 0
      %p221 = por %p219, %p220
      %p222 = scmp.ne.s32.totalorder %s214, %s216
      %p223 = scmp.eq.s32.totalorder %s38, 1
      %p224 = por %p222, %p223
      %p225 = scmp.ne.s32.totalorder %s216, %s217
      %p226 = scmp.eq.s32.totalorder %s38, 0
      %p227 = por %p225, %p226
      %p228 = scmp.ne.s32.totalorder %s216, %s217
      %p229 = scmp.eq.s32.totalorder %s39, 1
      %p230 = por %p228, %p229
      %p232 = scmp.ne.s32.totalorder %s217, %s231
      %p233 = scmp.eq.s32.totalorder %s39, 0
      %p234 = por %p232, %p233
      %s236 = sadd.s32 %s235, 1
      %p239 = scmp.eq.s32.totalorder %s33, 1
      %p240 = scmp.ne.s32.totalorder %s235, %s237
      %p241 = scmp.eq.s32.totalorder %s33, 0
      %p242 = por %p240, %p241
      %p243 = scmp.ne.s32.totalorder %s235, %s237
      %p244 = scmp.eq.s32.totalorder %s38, 1
      %p245 = por %p243, %p244
      %p246 = scmp.ne.s32.totalorder %s237, %s238
      %p247 = scmp.eq.s32.totalorder %s38, 0
      %p248 = por %p246, %p247
      %p249 = scmp.ne.s32.totalorder %s237, %s238
      %p250 = scmp.eq.s32.totalorder %s39, 1
      %p251 = por %p249, %p250
      %p253 = scmp.ne.s32.totalorder %s238, %s252
      %p254 = scmp.eq.s32.totalorder %s39, 0
      %p255 = por %p253, %p254
      %s257 = sadd.s32 %s256, 1
      %p260 = scmp.eq.s32.totalorder %s33, 1
      %p261 = scmp.ne.s32.totalorder %s256, %s258
      %p262 = scmp.eq.s32.totalorder %s33, 0
      %p263 = por %p261, %p262
      %p264 = scmp.ne.s32.totalorder %s256, %s258
      %p265 = scmp.eq.s32.totalorder %s38, 1
      %p266 = por %p264, %p265
      %p267 = scmp.ne.s32.totalorder %s258, %s259
      %p268 = scmp.eq.s32.totalorder %s38, 0
      %p269 = por %p267, %p268
      %p270 = scmp.ne.s32.totalorder %s258, %s259
      %p271 = scmp.eq.s32.totalorder %s39, 1
      %p272 = por %p270, %p271
      %p274 = scmp.ne.s32.totalorder %s259, %s273
      %p275 = scmp.eq.s32.totalorder %s39, 0
      %p276 = por %p274, %p275
      %s278 = sadd.s32 %s277, 1
      %p281 = scmp.eq.s32.totalorder %s33, 1
      %p282 = scmp.ne.s32.totalorder %s277, %s279
      %p283 = scmp.eq.s32.totalorder %s33, 0
      %p284 = por %p282, %p283
      %p285 = scmp.ne.s32.totalorder %s277, %s279
      %p286 = scmp.eq.s32.totalorder %s38, 1
      %p287 = por %p285, %p286
      %p288 = scmp.ne.s32.totalorder %s279, %s280
      %p289 = scmp.eq.s32.totalorder %s38, 0
      %p290 = por %p288, %p289
      %p291 = scmp.ne.s32.totalorder %s279, %s280
      %p292 = scmp.eq.s32.totalorder %s39, 1
      %p293 = por %p291, %p292
      %p295 = scmp.ne.s32.totalorder %s280, %s294
      %p296 = scmp.eq.s32.totalorder %s39, 0
      %p297 = por %p295, %p296
      %s299 = sadd.s32 %s298, 1
      %p302 = scmp.eq.s32.totalorder %s33, 1
      %p303 = scmp.ne.s32.totalorder %s298, %s300
      %p304 = scmp.eq.s32.totalorder %s33, 0
      %p305 = por %p303, %p304
      %p306 = scmp.ne.s32.totalorder %s298, %s300
      %p307 = scmp.eq.s32.totalorder %s38, 1
      %p308 = por %p306, %p307
      %p309 = scmp.ne.s32.totalorder %s300, %s301
      %p310 = scmp.eq.s32.totalorder %s38, 0
      %p311 = por %p309, %p310
      %p312 = scmp.ne.s32.totalorder %s300, %s301
      %p313 = scmp.eq.s32.totalorder %s39, 1
      %p314 = por %p312, %p313
      %p316 = scmp.ne.s32.totalorder %s301, %s315
      %p317 = scmp.eq.s32.totalorder %s39, 0
      %p318 = por %p316, %p317
      %s320 = sadd.s32 %s319, 1
      %p323 = scmp.eq.s32.totalorder %s33, 1
      %p324 = scmp.ne.s32.totalorder %s319, %s321
      %p325 = scmp.eq.s32.totalorder %s33, 0
      %p326 = por %p324, %p325
      %p327 = scmp.ne.s32.totalorder %s319, %s321
      %p328 = scmp.eq.s32.totalorder %s38, 1
      %p329 = por %p327, %p328
      %p330 = scmp.ne.s32.totalorder %s321, %s322
      %p331 = scmp.eq.s32.totalorder %s38, 0
      %p332 = por %p330, %p331
      %p333 = scmp.ne.s32.totalorder %s321, %s322
      %p334 = scmp.eq.s32.totalorder %s39, 1
      %p335 = por %p333, %p334
      %p337 = scmp.ne.s32.totalorder %s322, %s336
      %p338 = scmp.eq.s32.totalorder %s39, 0
      %p339 = por %p337, %p338
      %s341 = sadd.s32 %s340, 1
      %p344 = scmp.eq.s32.totalorder %s33, 1
      %p345 = scmp.ne.s32.totalorder %s340, %s342
      %p346 = scmp.eq.s32.totalorder %s33, 0
      %p347 = por %p345, %p346
      %p348 = scmp.ne.s32.totalorder %s340, %s342
      %p349 = scmp.eq.s32.totalorder %s38, 1
      %p350 = por %p348, %p349
      %p351 = scmp.ne.s32.totalorder %s342, %s343
      %p352 = scmp.eq.s32.totalorder %s38, 0
      %p353 = por %p351, %p352
      %p354 = scmp.ne.s32.totalorder %s342, %s343
      %p355 = scmp.eq.s32.totalorder %s39, 1
      %p356 = por %p354, %p355
      %p358 = scmp.ne.s32.totalorder %s343, %s357
      %p359 = scmp.eq.s32.totalorder %s39, 0
      %p360 = por %p358, %p359
      %s362 = sadd.s32 %s361, 1
      %p365 = scmp.eq.s32.totalorder %s33, 1
      %p366 = scmp.ne.s32.totalorder %s361, %s363
      %p367 = scmp.eq.s32.totalorder %s33, 0
      %p368 = por %p366, %p367
      %p369 = scmp.ne.s32.totalorder %s361, %s363
      %p370 = scmp.eq.s32.totalorder %s38, 1
      %p371 = por %p369, %p370
      %p372 = scmp.ne.s32.totalorder %s363, %s364
      %p373 = scmp.eq.s32.totalorder %s38, 0
      %p374 = por %p372, %p373
      %p375 = scmp.ne.s32.totalorder %s363, %s364
      %p376 = scmp.eq.s32.totalorder %s39, 1
      %p377 = por %p375, %p376
      %p379 = scmp.ne.s32.totalorder %s364, %s378
      %p380 = scmp.eq.s32.totalorder %s39, 0
      %p381 = por %p379, %p380
      %s383 = sadd.s32 %s382, 1
      %p386 = scmp.eq.s32.totalorder %s33, 1
      %p387 = scmp.ne.s32.totalorder %s382, %s384
      %p388 = scmp.eq.s32.totalorder %s33, 0
      %p389 = por %p387, %p388
      %p390 = scmp.ne.s32.totalorder %s382, %s384
      %p391 = scmp.eq.s32.totalorder %s38, 1
      %p392 = por %p390, %p391
      %p393 = scmp.ne.s32.totalorder %s384, %s385
      %p394 = scmp.eq.s32.totalorder %s38, 0
      %p395 = por %p393, %p394
      %p396 = scmp.ne.s32.totalorder %s384, %s385
      %p397 = scmp.eq.s32.totalorder %s39, 1
      %p398 = por %p396, %p397
      %p400 = scmp.ne.s32.totalorder %s385, %s399
      %p401 = scmp.eq.s32.totalorder %s39, 0
      %p402 = por %p400, %p401
      %s403 = ssub.s32 %s33, %s40
      %p404 = scmp.eq.s32.totalorder %s403, 0
      %s406 = sadd.s32 %s405, 1
      %s407 = scalar_select %p404, %s405, %s406
      %p410 = pneg %p404
      %p411 = scmp.eq.s32.totalorder %s33, 1
      %p412 = por %p410, %p411
      %p413 = scmp.ne.s32.totalorder %s405, %s408
      %p414 = scmp.eq.s32.totalorder %s33, 0
      %p415 = por %p413, %p414
      %p416 = scmp.ne.s32.totalorder %s405, %s408
      %p417 = scmp.eq.s32.totalorder %s38, 1
      %p418 = por %p416, %p417
      %p419 = scmp.ne.s32.totalorder %s408, %s409
      %p420 = scmp.eq.s32.totalorder %s38, 0
      %p421 = por %p419, %p420
      %p422 = scmp.ne.s32.totalorder %s408, %s409
      %p423 = scmp.eq.s32.totalorder %s39, 1
      %p424 = por %p422, %p423
      %p426 = scmp.ne.s32.totalorder %s409, %s425
      %p427 = scmp.eq.s32.totalorder %s39, 0
      %p428 = por %p426, %p427
      %p429 = scmp.le.s32.totalorder 1, %s33
      %p430 = scmp.lt.s32.totalorder %s33, 3
      %p431 = pnand %p429, %p430
      %p432 = pneg %p431
      // Predicated region
      $region9: #{encoder_layer.1} parent=5 // pred_check
        _
      $region10: #{encoder_layer.1} parent=5 // pred_check_branch
        %434 = sbr.rel (%p431) target = $region12
      $region11: #{encoder_layer.1} parent=5 // pred_region
        %s435 = ssub.s32 %s33, 1
        // Predicated region
        $region13: #{encoder_layer.1} parent=11 // pred_check
          %p436 = pneg %p80
        $region14: #{encoder_layer.1} parent=11 // pred_check_branch
          %438 = sbr.rel (%p436) target = $region16
        $region15: #{encoder_layer.1} parent=11 // pred_region
          _
        $region16: #{encoder_layer.1} parent=11 // pred_fallthru
          _
        // Predicated region
        $region17: #{encoder_layer.1} parent=11 // pred_check
          %p439 = pneg %p101
        $region18: #{encoder_layer.1} parent=11 // pred_check_branch
          %441 = sbr.rel (%p439) target = $region20
        $region19: #{encoder_layer.1} parent=11 // pred_region
          _
        $region20: #{encoder_layer.1} parent=11 // pred_fallthru
          _
        // Predicated region
        $region21: #{encoder_layer.1} parent=11 // pred_check
          %p442 = pneg %p122
        $region22: #{encoder_layer.1} parent=11 // pred_check_branch
          %444 = sbr.rel (%p442) target = $region24
        $region23: #{encoder_layer.1} parent=11 // pred_region
          _
        $region24: #{encoder_layer.1} parent=11 // pred_fallthru
          _
        // Predicated region
        $region25: #{encoder_layer.1} parent=11 // pred_check
          %p445 = pneg %p143
        $region26: #{encoder_layer.1} parent=11 // pred_check_branch
          %447 = sbr.rel (%p445) target = $region28
        $region27: #{encoder_layer.1} parent=11 // pred_region
          _
        $region28: #{encoder_layer.1} parent=11 // pred_fallthru
          _
        // Predicated region
        $region29: #{encoder_layer.1} parent=11 // pred_check
          %p448 = pneg %p164
        $region30: #{encoder_layer.1} parent=11 // pred_check_branch
          %450 = sbr.rel (%p448) target = $region32
        $region31: #{encoder_layer.1} parent=11 // pred_region
          _
        $region32: #{encoder_layer.1} parent=11 // pred_fallthru
          _
        // Predicated region
        $region33: #{encoder_layer.1} parent=11 // pred_check
          %p451 = pneg %p185
        $region34: #{encoder_layer.1} parent=11 // pred_check_branch
          %453 = sbr.rel (%p451) target = $region36
        $region35: #{encoder_layer.1} parent=11 // pred_region
          _
        $region36: #{encoder_layer.1} parent=11 // pred_fallthru
          _
        // Predicated region
        $region37: #{encoder_layer.1} parent=11 // pred_check
          %p454 = pneg %p206
        $region38: #{encoder_layer.1} parent=11 // pred_check_branch
          %456 = sbr.rel (%p454) target = $region40
        $region39: #{encoder_layer.1} parent=11 // pred_region
          _
        $region40: #{encoder_layer.1} parent=11 // pred_fallthru
          _
        // Predicated region
        $region41: #{encoder_layer.1} parent=11 // pred_check
          %p457 = pneg %p227
        $region42: #{encoder_layer.1} parent=11 // pred_check_branch
          %459 = sbr.rel (%p457) target = $region44
        $region43: #{encoder_layer.1} parent=11 // pred_region
          _
        $region44: #{encoder_layer.1} parent=11 // pred_fallthru
          _
        // Predicated region
        $region45: #{encoder_layer.1} parent=11 // pred_check
          %p460 = pneg %p248
        $region46: #{encoder_layer.1} parent=11 // pred_check_branch
          %462 = sbr.rel (%p460) target = $region48
        $region47: #{encoder_layer.1} parent=11 // pred_region
          _
        $region48: #{encoder_layer.1} parent=11 // pred_fallthru
          _
        // Predicated region
        $region49: #{encoder_layer.1} parent=11 // pred_check
          %p463 = pneg %p269
        $region50: #{encoder_layer.1} parent=11 // pred_check_branch
          %465 = sbr.rel (%p463) target = $region52
        $region51: #{encoder_layer.1} parent=11 // pred_region
          _
        $region52: #{encoder_layer.1} parent=11 // pred_fallthru
          _
        // Predicated region
        $region53: #{encoder_layer.1} parent=11 // pred_check
          %p466 = pneg %p290
        $region54: #{encoder_layer.1} parent=11 // pred_check_branch
          %468 = sbr.rel (%p466) target = $region56
        $region55: #{encoder_layer.1} parent=11 // pred_region
          _
        $region56: #{encoder_layer.1} parent=11 // pred_fallthru
          _
        // Predicated region
        $region57: #{encoder_layer.1} parent=11 // pred_check
          %p469 = pneg %p311
        $region58: #{encoder_layer.1} parent=11 // pred_check_branch
          %471 = sbr.rel (%p469) target = $region60
        $region59: #{encoder_layer.1} parent=11 // pred_region
          _
        $region60: #{encoder_layer.1} parent=11 // pred_fallthru
          _
        // Predicated region
        $region61: #{encoder_layer.1} parent=11 // pred_check
          %p472 = pneg %p332
        $region62: #{encoder_layer.1} parent=11 // pred_check_branch
          %474 = sbr.rel (%p472) target = $region64
        $region63: #{encoder_layer.1} parent=11 // pred_region
          _
        $region64: #{encoder_layer.1} parent=11 // pred_fallthru
          _
        // Predicated region
        $region65: #{encoder_layer.1} parent=11 // pred_check
          %p475 = pneg %p353
        $region66: #{encoder_layer.1} parent=11 // pred_check_branch
          %477 = sbr.rel (%p475) target = $region68
        $region67: #{encoder_layer.1} parent=11 // pred_region
          _
        $region68: #{encoder_layer.1} parent=11 // pred_fallthru
          _
        // Predicated region
        $region69: #{encoder_layer.1} parent=11 // pred_check
          %p478 = pneg %p374
        $region70: #{encoder_layer.1} parent=11 // pred_check_branch
          %480 = sbr.rel (%p478) target = $region72
        $region71: #{encoder_layer.1} parent=11 // pred_region
          _
        $region72: #{encoder_layer.1} parent=11 // pred_fallthru
          _
        // Predicated region
        $region73: #{encoder_layer.1} parent=11 // pred_check
          %p481 = pneg %p395
        $region74: #{encoder_layer.1} parent=11 // pred_check_branch
          %483 = sbr.rel (%p481) target = $region76
        $region75: #{encoder_layer.1} parent=11 // pred_region
          _
        $region76: #{encoder_layer.1} parent=11 // pred_fallthru
          _
      $region12: #{encoder_layer.1} parent=5 // pred_fallthru
        _
      %p484 = scmp.lt.s32.totalorder %s33, 2
      // Predicated region
      $region77: #{encoder_layer.1} parent=5 // pred_check
        %p485 = pneg %p484
      $region78: #{encoder_layer.1} parent=5 // pred_check_branch
        %487 = sbr.rel (%p485) target = $region80
      $region79: #{encoder_layer.1} parent=5 // pred_region
        // Predicated region
        $region81: #{encoder_layer.1} parent=79 // pred_check
          %p488 = pneg %p53
        $region82: #{encoder_layer.1} parent=79 // pred_check_branch
          %490 = sbr.rel (%p488) target = $region84
        $region83: #{encoder_layer.1} parent=79 // pred_region
          %p491 = scmp.lt.s32.totalorder %s33, 1
          %s492 = scalar_select %p491, %s33, 1
          %s493 = smul.addr %s492, 8
          %s494 = scalar_lea.vmem %s1, %s493
        $region84: #{encoder_layer.1} parent=79 // pred_fallthru
          _
      $region80: #{encoder_layer.1} parent=5 // pred_fallthru
        _
      %p495 = scmp.le.s32.totalorder 1, %s33
      %p496 = scmp.lt.s32.totalorder %s33, 3
      %p497 = pnand %p495, %p496
      %p498 = pneg %p497
      // Predicated region
      $region85: #{encoder_layer.1} parent=5 // pred_check
        _
      $region86: #{encoder_layer.1} parent=5 // pred_check_branch
        %500 = sbr.rel (%p497) target = $region88
      $region87: #{encoder_layer.1} parent=5 // pred_region
        %s501 = ssub.s32 %s33, 1
        %p502 = scmp.lt.s32.totalorder %s38, 1
        %s503 = scalar_select %p502, %s38, 1
        %s504 = smul.addr %s503, 8
        %s505 = scalar_lea.vmem %s1, %s504
        %p506 = pneg %p59
        %p507 = pneg %p56
        %p508 = pneg %p80
        %p509 = pneg %p77
        %p510 = pneg %p101
        %p511 = pneg %p98
        %p512 = pneg %p122
        %p513 = pneg %p119
        %p514 = pneg %p143
        %p515 = pneg %p140
        %p516 = pneg %p164
        %p517 = pneg %p161
        %p518 = pneg %p185
        %p519 = pneg %p182
        %p520 = pneg %p206
        %p521 = pneg %p203
        %p522 = pneg %p227
        %p523 = pneg %p224
        %p524 = pneg %p248
        %p525 = pneg %p245
        %p526 = pneg %p269
        %p527 = pneg %p266
        %p528 = pneg %p290
        %p529 = pneg %p287
        %p530 = pneg %p311
        %p531 = pneg %p308
        %p532 = pneg %p332
        %p533 = pneg %p329
        %p534 = pneg %p353
        %p535 = pneg %p350
        %p536 = pneg %p374
        %p537 = pneg %p371
        %p538 = pneg %p395
        %p539 = pneg %p392
        %p540 = pneg %p421
        %p541 = pneg %p418
        %s542 = sand.u32 %s408, 1
        %s543 = scalar_lea.sflag [#allocation5], %s542
        %s544 = sand.u32 %s408, 1
        %s545 = smul.addr %s544, 8
        %s546 = scalar_lea.vmem [#allocation4], %s545
        %p547 = scmp.lt.s32.totalorder %s38, 1
        %s548 = scalar_select %p547, %s38, 1
        %s549 = smul.addr %s548, 8
        %s550 = scalar_lea.vmem %s1, %s549
        %v552 = vld [vmem:[%s550] sm:$0xff]
        %v553 = vpack.c.bf16 %v552, %v552
        %v554 = vld [vmem:[%s2] sm:$0xf]
        %v555 = vld [vmem:[%s2 + $0x4] sm:$0xf]
        %v556 = vld [vmem:[%s2 + $0x8] sm:$0xf]
        %v557 = vld [vmem:[%s2 + $0xc] sm:$0xf]
        %v558 = vld [vmem:[%s3] sm:$0x1]
        %v560 = vlaneseq
        %v561 = vshrl.u32 %v560, 7
        %v562 = vsub.s32 0, %v561
        %v563 = vrot.slane %v558, %v562
        %v569 = vunpack.c.l.b16 %v554
        %v570 = vunpack.c.l.b16 %v555
        %v571 = vunpack.c.l.b16 %v556
        %v572 = vunpack.c.l.b16 %v557
        %v573 = vpack.c.b16 %v570, %v569
        %v574 = vpack.c.b16 %v572, %v571
        %vm577 = vcmask 261120
        %v579 = vsel %vm577, %v553, 0
        %581 = vmatprep.subr.bf16.mxu0 0
        %582 = vmatpush1.bf16.msra.mxu0 0
        %583 = vmatprep.subr.bf16.mxu0 0
        %584 = vmatpush1.bf16.msra.mxu0 0
        %585 = vmatprep.subr.bf16.mxu0 0
        %586 = vmatpush1.bf16.msra.mxu0 0
        %587 = vmatprep.subr.bf16.mxu0 0
        %588 = vmatpush1.bf16.msra.mxu0 0
        %589 = vmatprep.subr.bf16.mxu0 0
        %590 = vmatpush1.bf16.msra.mxu0 0
        %591 = vmatprep.subr.bf16.mxu0 0
        %592 = vmatpush1.bf16.msra.mxu0 0
        %593 = vmatprep.subr.bf16.mxu0 0
        %594 = vmatpush1.bf16.msra.mxu0 %v574
        %595 = vmatprep.subr.bf16.mxu0 0
        %596 = vmatpush1.bf16.msra.mxu0 %v573
        %597 = vmatprep.subr.bf16.mxu0 0
        %598 = vmatpush2.bf16.msra.mxu0 0
        %599 = vmatprep.subr.bf16.mxu0 0
        %600 = vmatpush2.bf16.msra.mxu0 0
        %601 = vmatprep.subr.bf16.mxu0 0
        %602 = vmatpush2.bf16.msra.mxu0 0
        %603 = vmatprep.subr.bf16.mxu0 0
        %604 = vmatpush2.bf16.msra.mxu0 0
        %605 = vmatprep.subr.bf16.mxu0 0
        %606 = vmatpush2.bf16.msra.mxu0 0
        %607 = vmatprep.subr.bf16.mxu0 0
        %608 = vmatpush2.bf16.msra.mxu0 0
        %609 = vmatprep.subr.bf16.mxu0 0
        %610 = vmatpush2.bf16.msra.mxu0 0
        %611 = vmatprep.subr.bf16.mxu0 0
        %612 = vmatpush2.bf16.msra.mxu0 0
        %613 = vmatprep.mubr.bf16.mxu0 0
        %614 = vmatmul.mubr.bf16.gmra.mxu0 %v579
        %v615 = vpop.f32.mrf.mxu0
        %v616 = vadd.f32 %v563, %v615
        %v617 = vpop.f32.mrf.mxu0
        %v618 = vpop.f32.mrf.mxu0
        %v619 = vpop.f32.mrf.mxu0
        %620 = vdwg.mxu0
        %v621 = vld [vmem:[%s4] sm:$0xf]
        %v622 = vld [vmem:[%s4 + $0x4] sm:$0xf]
        %v623 = vld [vmem:[%s4 + $0x8] sm:$0xf]
        %v624 = vld [vmem:[%s4 + $0xc] sm:$0xf]
        %v625 = vld [vmem:[%s5] sm:$0x1]
        %v627 = vlaneseq
        %v628 = vshrl.u32 %v627, 7
        %v629 = vsub.s32 0, %v628
        %v630 = vrot.slane %v625, %v629
        %v636 = vunpack.c.l.b16 %v621
        %v637 = vunpack.c.l.b16 %v622
        %v638 = vunpack.c.l.b16 %v623
        %v639 = vunpack.c.l.b16 %v624
        %v640 = vpack.c.b16 %v637, %v636
        %v641 = vpack.c.b16 %v639, %v638
        %644 = vmatprep.subr.bf16.mxu0 0
        %645 = vmatpush1.bf16.msra.mxu0 0
        %646 = vmatprep.subr.bf16.mxu0 0
        %647 = vmatpush1.bf16.msra.mxu0 0
        %648 = vmatprep.subr.bf16.mxu0 0
        %649 = vmatpush1.bf16.msra.mxu0 0
        %650 = vmatprep.subr.bf16.mxu0 0
        %651 = vmatpush1.bf16.msra.mxu0 0
        %652 = vmatprep.subr.bf16.mxu0 0
        %653 = vmatpush1.bf16.msra.mxu0 0
        %654 = vmatprep.subr.bf16.mxu0 0
        %655 = vmatpush1.bf16.msra.mxu0 0
        %656 = vmatprep.subr.bf16.mxu0 0
        %657 = vmatpush1.bf16.msra.mxu0 %v641
        %658 = vmatprep.subr.bf16.mxu0 0
        %659 = vmatpush1.bf16.msra.mxu0 %v640
        %660 = vmatprep.subr.bf16.mxu0 0
        %661 = vmatpush2.bf16.msra.mxu0 0
        %662 = vmatprep.subr.bf16.mxu0 0
        %663 = vmatpush2.bf16.msra.mxu0 0
        %664 = vmatprep.subr.bf16.mxu0 0
        %665 = vmatpush2.bf16.msra.mxu0 0
        %666 = vmatprep.subr.bf16.mxu0 0
        %667 = vmatpush2.bf16.msra.mxu0 0
        %668 = vmatprep.subr.bf16.mxu0 0
        %669 = vmatpush2.bf16.msra.mxu0 0
        %670 = vmatprep.subr.bf16.mxu0 0
        %671 = vmatpush2.bf16.msra.mxu0 0
        %672 = vmatprep.subr.bf16.mxu0 0
        %673 = vmatpush2.bf16.msra.mxu0 0
        %674 = vmatprep.subr.bf16.mxu0 0
        %675 = vmatpush2.bf16.msra.mxu0 0
        %676 = vmatprep.mubr.bf16.mxu0 0
        %677 = vmatmul.mubr.bf16.gmra.mxu0 %v579
        %v678 = vpop.f32.mrf.mxu0
        %v679 = vadd.f32 %v630, %v678
        %v680 = vpop.f32.mrf.mxu0
        %v681 = vpop.f32.mrf.mxu0
        %v682 = vpop.f32.mrf.mxu0
        %683 = vdwg.mxu0
        %v684 = vld [vmem:[%s6] sm:$0xf]
        %v685 = vld [vmem:[%s6 + $0x4] sm:$0xf]
        %v686 = vld [vmem:[%s6 + $0x8] sm:$0xf]
        %v687 = vld [vmem:[%s6 + $0xc] sm:$0xf]
        %v688 = vld [vmem:[%s7] sm:$0x1]
        %v690 = vlaneseq
        %v691 = vshrl.u32 %v690, 7
        %v692 = vsub.s32 0, %v691
        %v693 = vrot.slane %v688, %v692
        %v699 = vunpack.c.l.b16 %v684
        %v700 = vunpack.c.l.b16 %v685
        %v701 = vunpack.c.l.b16 %v686
        %v702 = vunpack.c.l.b16 %v687
        %v703 = vpack.c.b16 %v700, %v699
        %v704 = vpack.c.b16 %v702, %v701
        %707 = vmatprep.subr.bf16.mxu0 0
        %708 = vmatpush1.bf16.msra.mxu0 0
        %709 = vmatprep.subr.bf16.mxu0 0
        %710 = vmatpush1.bf16.msra.mxu0 0
        %711 = vmatprep.subr.bf16.mxu0 0
        %712 = vmatpush1.bf16.msra.mxu0 0
        %713 = vmatprep.subr.bf16.mxu0 0
        %714 = vmatpush1.bf16.msra.mxu0 0
        %715 = vmatprep.subr.bf16.mxu0 0
        %716 = vmatpush1.bf16.msra.mxu0 0
        %717 = vmatprep.subr.bf16.mxu0 0
        %718 = vmatpush1.bf16.msra.mxu0 0
        %719 = vmatprep.subr.bf16.mxu0 0
        %720 = vmatpush1.bf16.msra.mxu0 %v704
        %721 = vmatprep.subr.bf16.mxu0 0
        %722 = vmatpush1.bf16.msra.mxu0 %v703
        %723 = vmatprep.subr.bf16.mxu0 0
        %724 = vmatpush2.bf16.msra.mxu0 0
        %725 = vmatprep.subr.bf16.mxu0 0
        %726 = vmatpush2.bf16.msra.mxu0 0
        %727 = vmatprep.subr.bf16.mxu0 0
        %728 = vmatpush2.bf16.msra.mxu0 0
        %729 = vmatprep.subr.bf16.mxu0 0
        %730 = vmatpush2.bf16.msra.mxu0 0
        %731 = vmatprep.subr.bf16.mxu0 0
        %732 = vmatpush2.bf16.msra.mxu0 0
        %733 = vmatprep.subr.bf16.mxu0 0
        %734 = vmatpush2.bf16.msra.mxu0 0
        %735 = vmatprep.subr.bf16.mxu0 0
        %736 = vmatpush2.bf16.msra.mxu0 0
        %737 = vmatprep.subr.bf16.mxu0 0
        %738 = vmatpush2.bf16.msra.mxu0 0
        %739 = vmatprep.mubr.bf16.mxu0 0
        %740 = vmatmul.mubr.bf16.gmra.mxu0 %v579
        %v741 = vpop.f32.mrf.mxu0
        %v742 = vadd.f32 %v693, %v741
        %v743 = vpop.f32.mrf.mxu0
        %v744 = vpop.f32.mrf.mxu0
        %v745 = vpop.f32.mrf.mxu0
        %746 = vdwg.mxu0
        %s747 = sld [smem:[#allocation3 + %s38]]
        %v748 = vlaneseq
        %v749 = vand.u32 %v748, 127
        %v750 = vstv %s747
        %vm751 = vcmp.ge.s32.totalorder %v749, %v750
        %v752 = vsel %vm751, 1, 0
        %vm753 = vcmp.eq.s32.totalorder %v752, 1
        %v754 = vpack.c.bf16 %v616, %v616
        %v755 = vpack.c.bf16 %v679, %v679
        %v756 = vpack.c.bf16 %v742, %v742
        %vm757 = vcmask 130048
        %v759 = vsel %vm757, %v754, 0
        %v762 = vsel %vm757, %v755, 0
        %764 = vmatprep.subr.bf16.mxu0 0
        %765 = vmatpush1.bf16.xpose.msra.mxu0 0
        %766 = vmatprep.subr.bf16.mxu0 0
        %767 = vmatpush1.bf16.xpose.msra.mxu0 0
        %768 = vmatprep.subr.bf16.mxu0 0
        %769 = vmatpush1.bf16.xpose.msra.mxu0 0
        %770 = vmatprep.subr.bf16.mxu0 0
        %771 = vmatpush1.bf16.xpose.msra.mxu0 0
        %772 = vmatprep.subr.bf16.mxu0 0
        %773 = vmatpush1.bf16.xpose.msra.mxu0 0
        %774 = vmatprep.subr.bf16.mxu0 0
        %775 = vmatpush1.bf16.xpose.msra.mxu0 0
        %776 = vmatprep.subr.bf16.mxu0 0
        %777 = vmatpush1.bf16.xpose.msra.mxu0 0
        %778 = vmatprep.subr.bf16.mxu0 0
        %779 = vmatpush1.bf16.xpose.msra.mxu0 %v762
        %780 = vmatprep.subr.bf16.mxu0 0
        %781 = vmatpush2.bf16.xpose.msra.mxu0 0
        %782 = vmatprep.subr.bf16.mxu0 0
        %783 = vmatpush2.bf16.xpose.msra.mxu0 0
        %784 = vmatprep.subr.bf16.mxu0 0
        %785 = vmatpush2.bf16.xpose.msra.mxu0 0
        %786 = vmatprep.subr.bf16.mxu0 0
        %787 = vmatpush2.bf16.xpose.msra.mxu0 0
        %788 = vmatprep.subr.bf16.mxu0 0
        %789 = vmatpush2.bf16.xpose.msra.mxu0 0
        %790 = vmatprep.subr.bf16.mxu0 0
        %791 = vmatpush2.bf16.xpose.msra.mxu0 0
        %792 = vmatprep.subr.bf16.mxu0 0
        %793 = vmatpush2.bf16.xpose.msra.mxu0 0
        %794 = vmatprep.subr.bf16.mxu0 0
        %795 = vmatpush2.bf16.xpose.msra.mxu0 0
        %796 = vmatprep.mubr.bf16.mxu0 0
        %797 = vmatmul.mubr.bf16.gmra.mxu0 %v759
        %v798 = vpop.f32.mrf.mxu0
        %v799 = vadd.f32 0.0, %v798
        %v800 = vpop.f32.mrf.mxu0
        %v801 = vpop.f32.mrf.mxu0
        %v802 = vpop.f32.mrf.mxu0
        %803 = vdwg.mxu0
        %v804 = vmul.f32 %v799, 0.25
        %v805 = vsel %vm753, -1e+09, %v804
        %vm806 = vcmask 64512
        %v807 = vsel %vm806, %v805, -inf
        %808 = vmax.xlane.f32.xlu0 %v807
        %v809 = vpop.xlane.xlu0 %808
        %v810 = vsub.f32 %v805, %v809
        %v811 = vmul.f32 %v810, 1.442695
        %v812 = vpow.pop %v811
        %v813 = vsel %vm806, %v812, 0.0
        %814 = vadd.xlane.f32.xlu0 %v813
        %v815 = vpop.xlane.xlu0 %814
        %v816 = vrcp.pop %v815
        %v817 = vmul.f32 %v812, %v816
        %v818 = vpack.c.bf16 %v817, %v817
        %v820 = vsel %vm806, %v818, 0
        %vm822 = vcmask 1043456
        %v824 = vsel %vm822, %v756, 0
        %826 = vmatprep.subr.bf16.mxu0 0
        %827 = vmatpush1.bf16.msra.mxu0 0
        %828 = vmatprep.subr.bf16.mxu0 0
        %829 = vmatpush1.bf16.msra.mxu0 0
        %830 = vmatprep.subr.bf16.mxu0 0
        %831 = vmatpush1.bf16.msra.mxu0 0
        %832 = vmatprep.subr.bf16.mxu0 0
        %833 = vmatpush1.bf16.msra.mxu0 0
        %834 = vmatprep.subr.bf16.mxu0 0
        %835 = vmatpush1.bf16.msra.mxu0 0
        %836 = vmatprep.subr.bf16.mxu0 0
        %837 = vmatpush1.bf16.msra.mxu0 0
        %838 = vmatprep.subr.bf16.mxu0 0
        %839 = vmatpush1.bf16.msra.mxu0 0
        %840 = vmatprep.subr.bf16.mxu0 0
        %841 = vmatpush1.bf16.msra.mxu0 %v824
        %842 = vmatprep.subr.bf16.mxu0 0
        %843 = vmatpush2.bf16.msra.mxu0 0
        %844 = vmatprep.subr.bf16.mxu0 0
        %845 = vmatpush2.bf16.msra.mxu0 0
        %846 = vmatprep.subr.bf16.mxu0 0
        %847 = vmatpush2.bf16.msra.mxu0 0
        %848 = vmatprep.subr.bf16.mxu0 0
        %849 = vmatpush2.bf16.msra.mxu0 0
        %850 = vmatprep.subr.bf16.mxu0 0
        %851 = vmatpush2.bf16.msra.mxu0 0
        %852 = vmatprep.subr.bf16.mxu0 0
        %853 = vmatpush2.bf16.msra.mxu0 0
        %854 = vmatprep.subr.bf16.mxu0 0
        %855 = vmatpush2.bf16.msra.mxu0 0
        %856 = vmatprep.subr.bf16.mxu0 0
        %857 = vmatpush2.bf16.msra.mxu0 0
        %858 = vmatprep.mubr.bf16.mxu0 0
        %859 = vmatmul.mubr.bf16.gmra.mxu0 %v820
        %v860 = vpop.f32.mrf.mxu0
        %v861 = vadd.f32 0.0, %v860
        %v862 = vpop.f32.mrf.mxu0
        %v863 = vpop.f32.mrf.mxu0
        %v864 = vpop.f32.mrf.mxu0
        %865 = vdwg.mxu0
        %v866 = vld [vmem:[%s8] sm:$0xf]
        %v867 = vld [vmem:[%s8 + $0x4] sm:$0xf]
        %v868 = vpack.c.bf16 %v861, %v861
        %870 = vrot.lane.b32.xlu0 %v754, 112
        %v871 = vpop.permute.xlu0 %870
        %873 = vrot.lane.b32.xlu0 %v755, 112
        %v874 = vpop.permute.xlu0 %873
        %v876 = vsel %vm757, %v871, 0
        %v879 = vsel %vm757, %v874, 0
        %881 = vmatprep.subr.bf16.mxu0 0
        %882 = vmatpush1.bf16.xpose.msra.mxu0 0
        %883 = vmatprep.subr.bf16.mxu0 0
        %884 = vmatpush1.bf16.xpose.msra.mxu0 0
        %885 = vmatprep.subr.bf16.mxu0 0
        %886 = vmatpush1.bf16.xpose.msra.mxu0 0
        %887 = vmatprep.subr.bf16.mxu0 0
        %888 = vmatpush1.bf16.xpose.msra.mxu0 0
        %889 = vmatprep.subr.bf16.mxu0 0
        %890 = vmatpush1.bf16.xpose.msra.mxu0 0
        %891 = vmatprep.subr.bf16.mxu0 0
        %892 = vmatpush1.bf16.xpose.msra.mxu0 0
        %893 = vmatprep.subr.bf16.mxu0 0
        %894 = vmatpush1.bf16.xpose.msra.mxu0 0
        %895 = vmatprep.subr.bf16.mxu0 0
        %896 = vmatpush1.bf16.xpose.msra.mxu0 %v879
        %897 = vmatprep.subr.bf16.mxu0 0
        %898 = vmatpush2.bf16.xpose.msra.mxu0 0
        %899 = vmatprep.subr.bf16.mxu0 0
        %900 = vmatpush2.bf16.xpose.msra.mxu0 0
        %901 = vmatprep.subr.bf16.mxu0 0
        %902 = vmatpush2.bf16.xpose.msra.mxu0 0
        %903 = vmatprep.subr.bf16.mxu0 0
        %904 = vmatpush2.bf16.xpose.msra.mxu0 0
        %905 = vmatprep.subr.bf16.mxu0 0
        %906 = vmatpush2.bf16.xpose.msra.mxu0 0
        %907 = vmatprep.subr.bf16.mxu0 0
        %908 = vmatpush2.bf16.xpose.msra.mxu0 0
        %909 = vmatprep.subr.bf16.mxu0 0
        %910 = vmatpush2.bf16.xpose.msra.mxu0 0
        %911 = vmatprep.subr.bf16.mxu0 0
        %912 = vmatpush2.bf16.xpose.msra.mxu0 0
        %913 = vmatprep.mubr.bf16.mxu0 0
        %914 = vmatmul.mubr.bf16.gmra.mxu0 %v876
        %v915 = vpop.f32.mrf.mxu0
        %v916 = vadd.f32 0.0, %v915
        %v917 = vpop.f32.mrf.mxu0
        %v918 = vpop.f32.mrf.mxu0
        %v919 = vpop.f32.mrf.mxu0
        %920 = vdwg.mxu0
        %v921 = vmul.f32 %v916, 0.25
        %v922 = vsel %vm753, -1e+09, %v921
        %v923 = vsel %vm806, %v922, -inf
        %924 = vmax.xlane.f32.xlu0 %v923
        %v925 = vpop.xlane.xlu0 %924
        %v926 = vsub.f32 %v922, %v925
        %v927 = vmul.f32 %v926, 1.442695
        %v928 = vpow.pop %v927
        %v929 = vsel %vm806, %v928, 0.0
        %930 = vadd.xlane.f32.xlu0 %v929
        %v931 = vpop.xlane.xlu0 %930
        %v932 = vrcp.pop %v931
        %v933 = vmul.f32 %v928, %v932
        %v934 = vpack.c.bf16 %v933, %v933
        %936 = vrot.lane.b32.xlu0 %v756, 112
        %v937 = vpop.permute.xlu0 %936
        %v939 = vsel %vm806, %v934, 0
        %v942 = vsel %vm822, %v937, 0
        %944 = vmatprep.subr.bf16.mxu0 0
        %945 = vmatpush1.bf16.msra.mxu0 0
        %946 = vmatprep.subr.bf16.mxu0 0
        %947 = vmatpush1.bf16.msra.mxu0 0
        %948 = vmatprep.subr.bf16.mxu0 0
        %949 = vmatpush1.bf16.msra.mxu0 0
        %950 = vmatprep.subr.bf16.mxu0 0
        %951 = vmatpush1.bf16.msra.mxu0 0
        %952 = vmatprep.subr.bf16.mxu0 0
        %953 = vmatpush1.bf16.msra.mxu0 0
        %954 = vmatprep.subr.bf16.mxu0 0
        %955 = vmatpush1.bf16.msra.mxu0 0
        %956 = vmatprep.subr.bf16.mxu0 0
        %957 = vmatpush1.bf16.msra.mxu0 0
        %958 = vmatprep.subr.bf16.mxu0 0
        %959 = vmatpush1.bf16.msra.mxu0 %v942
        %960 = vmatprep.subr.bf16.mxu0 0
        %961 = vmatpush2.bf16.msra.mxu0 0
        %962 = vmatprep.subr.bf16.mxu0 0
        %963 = vmatpush2.bf16.msra.mxu0 0
        %964 = vmatprep.subr.bf16.mxu0 0
        %965 = vmatpush2.bf16.msra.mxu0 0
        %966 = vmatprep.subr.bf16.mxu0 0
        %967 = vmatpush2.bf16.msra.mxu0 0
        %968 = vmatprep.subr.bf16.mxu0 0
        %969 = vmatpush2.bf16.msra.mxu0 0
        %970 = vmatprep.subr.bf16.mxu0 0
        %971 = vmatpush2.bf16.msra.mxu0 0
        %972 = vmatprep.subr.bf16.mxu0 0
        %973 = vmatpush2.bf16.msra.mxu0 0
        %974 = vmatprep.subr.bf16.mxu0 0
        %975 = vmatpush2.bf16.msra.mxu0 0
        %976 = vmatprep.mubr.bf16.mxu0 0
        %977 = vmatmul.mubr.bf16.gmra.mxu0 %v939
        %v978 = vpop.f32.mrf.mxu0
        %v979 = vadd.f32 0.0, %v978
        %v980 = vpop.f32.mrf.mxu0
        %v981 = vpop.f32.mrf.mxu0
        %v982 = vpop.f32.mrf.mxu0
        %983 = vdwg.mxu0
        %v984 = vld [vmem:[%s8 + $0x8] sm:$0xf]
        %v985 = vld [vmem:[%s8 + $0xc] sm:$0xf]
        %v986 = vpack.c.bf16 %v979, %v979
        %v989 = vunpack.c.l.b16 %v984
        %v990 = vunpack.c.l.b16 %v985
        %v991 = vpack.c.b16 %v990, %v989
        %v994 = vsel %vm757, %v986, 0
        %996 = vmatprep.subr.bf16.mxu0 0
        %997 = vmatpush1.bf16.msra.mxu0 0
        %998 = vmatprep.subr.bf16.mxu0 0
        %999 = vmatpush1.bf16.msra.mxu0 0
        %1000 = vmatprep.subr.bf16.mxu0 0
        %1001 = vmatpush1.bf16.msra.mxu0 0
        %1002 = vmatprep.subr.bf16.mxu0 0
        %1003 = vmatpush1.bf16.msra.mxu0 0
        %1004 = vmatprep.subr.bf16.mxu0 0
        %1005 = vmatpush1.bf16.msra.mxu0 0
        %1006 = vmatprep.subr.bf16.mxu0 0
        %1007 = vmatpush1.bf16.msra.mxu0 0
        %1008 = vmatprep.subr.bf16.mxu0 0
        %1009 = vmatpush1.bf16.msra.mxu0 0
        %1010 = vmatprep.subr.bf16.mxu0 0
        %1011 = vmatpush1.bf16.msra.mxu0 %v991
        %1012 = vmatprep.subr.bf16.mxu0 0
        %1013 = vmatpush2.bf16.msra.mxu0 0
        %1014 = vmatprep.subr.bf16.mxu0 0
        %1015 = vmatpush2.bf16.msra.mxu0 0
        %1016 = vmatprep.subr.bf16.mxu0 0
        %1017 = vmatpush2.bf16.msra.mxu0 0
        %1018 = vmatprep.subr.bf16.mxu0 0
        %1019 = vmatpush2.bf16.msra.mxu0 0
        %1020 = vmatprep.subr.bf16.mxu0 0
        %1021 = vmatpush2.bf16.msra.mxu0 0
        %1022 = vmatprep.subr.bf16.mxu0 0
        %1023 = vmatpush2.bf16.msra.mxu0 0
        %1024 = vmatprep.subr.bf16.mxu0 0
        %1025 = vmatpush2.bf16.msra.mxu0 0
        %1026 = vmatprep.subr.bf16.mxu0 0
        %1027 = vmatpush2.bf16.msra.mxu0 0
        %1028 = vmatprep.mubr.bf16.mxu0 0
        %1029 = vmatmul.mubr.bf16.gmra.mxu0 %v994
        %v1030 = vpop.f32.mrf.mxu0
        %v1031 = vadd.f32 0.0, %v1030
        %v1032 = vpop.f32.mrf.mxu0
        %v1033 = vpop.f32.mrf.mxu0
        %v1034 = vpop.f32.mrf.mxu0
        %1035 = vdwg.mxu0
        %v1038 = vunpack.c.l.b16 %v866
        %v1039 = vunpack.c.l.b16 %v867
        %v1040 = vpack.c.b16 %v1039, %v1038
        %v1043 = vsel %vm757, %v868, 0
        %1045 = vmatprep.subr.bf16.mxu0 0
        %1046 = vmatpush1.bf16.msra.mxu0 0
        %1047 = vmatprep.subr.bf16.mxu0 0
        %1048 = vmatpush1.bf16.msra.mxu0 0
        %1049 = vmatprep.subr.bf16.mxu0 0
        %1050 = vmatpush1.bf16.msra.mxu0 0
        %1051 = vmatprep.subr.bf16.mxu0 0
        %1052 = vmatpush1.bf16.msra.mxu0 0
        %1053 = vmatprep.subr.bf16.mxu0 0
        %1054 = vmatpush1.bf16.msra.mxu0 0
        %1055 = vmatprep.subr.bf16.mxu0 0
        %1056 = vmatpush1.bf16.msra.mxu0 0
        %1057 = vmatprep.subr.bf16.mxu0 0
        %1058 = vmatpush1.bf16.msra.mxu0 0
        %1059 = vmatprep.subr.bf16.mxu0 0
        %1060 = vmatpush1.bf16.msra.mxu0 %v1040
        %1061 = vmatprep.subr.bf16.mxu0 0
        %1062 = vmatpush2.bf16.msra.mxu0 0
        %1063 = vmatprep.subr.bf16.mxu0 0
        %1064 = vmatpush2.bf16.msra.mxu0 0
        %1065 = vmatprep.subr.bf16.mxu0 0
        %1066 = vmatpush2.bf16.msra.mxu0 0
        %1067 = vmatprep.subr.bf16.mxu0 0
        %1068 = vmatpush2.bf16.msra.mxu0 0
        %1069 = vmatprep.subr.bf16.mxu0 0
        %1070 = vmatpush2.bf16.msra.mxu0 0
        %1071 = vmatprep.subr.bf16.mxu0 0
        %1072 = vmatpush2.bf16.msra.mxu0 0
        %1073 = vmatprep.subr.bf16.mxu0 0
        %1074 = vmatpush2.bf16.msra.mxu0 0
        %1075 = vmatprep.subr.bf16.mxu0 0
        %1076 = vmatpush2.bf16.msra.mxu0 0
        %1077 = vmatprep.mubr.bf16.mxu0 0
        %1078 = vmatmul.mubr.bf16.gmra.mxu0 %v1043
        %v1079 = vpop.f32.mrf.mxu0
        %v1080 = vadd.f32 %v1031, %v1079
        %v1081 = vpop.f32.mrf.mxu0
        %v1082 = vpop.f32.mrf.mxu0
        %v1083 = vpop.f32.mrf.mxu0
        %1084 = vdwg.mxu0
        %v1085 = vld [vmem:[%s9] sm:$0x1]
        %v1087 = vlaneseq
        %v1088 = vshrl.u32 %v1087, 7
        %v1089 = vsub.s32 0, %v1088
        %v1090 = vrot.slane %v1085, %v1089
        %v1092 = vadd.f32 %v1080, %v1090
        %v1093 = vadd.f32 %v1092, %v552
        %v1094 = vld [vmem:[%s10] sm:$0x1]
        %v1095 = vld [vmem:[%s11] sm:$0x1]
        %v1096 = vsel %vm577, %v1093, 0.0
        %1097 = vadd.xlane.f32.xlu0 %v1096
        %v1098 = vpop.xlane.xlu0 %1097
        %v1099 = vrcp.pop 32.0
        %v1100 = vmul.f32 %v1098, %v1099
        %v1101 = vsub.f32 %v1093, %v1100
        %v1102 = vmul.f32 %v1101, %v1101
        %v1103 = vsel %vm577, %v1102, 0.0
        %1104 = vadd.xlane.f32.xlu0 %v1103
        %v1105 = vpop.xlane.xlu0 %1104
        %v1106 = vmul.f32 %v1105, %v1099
        %v1107 = vadd.f32 %v1106, 1e-05
        %v1108 = vrsqrt.pop %v1107
        %v1109 = vmul.f32 %v1101, %v1108
        %v1111 = vlaneseq
        %v1112 = vshrl.u32 %v1111, 7
        %v1113 = vsub.s32 0, %v1112
        %v1114 = vrot.slane %v1094, %v1113
        %v1116 = vmul.f32 %v1109, %v1114
        %v1118 = vlaneseq
        %v1119 = vshrl.u32 %v1118, 7
        %v1120 = vsub.s32 0, %v1119
        %v1121 = vrot.slane %v1095, %v1120
        %v1123 = vadd.f32 %v1116, %v1121
        %v1124 = vpack.c.bf16 %v1123, %v1123
        %v1125 = vld [vmem:[%s12] sm:$0xf]
        %v1126 = vld [vmem:[%s12 + $0x4] sm:$0xf]
        %v1127 = vld [vmem:[%s12 + $0x8] sm:$0xf]
        %v1128 = vld [vmem:[%s12 + $0xc] sm:$0xf]
        %v1129 = vld [vmem:[%s13] sm:$0x1]
        %v1131 = vlaneseq
        %v1132 = vshrl.u32 %v1131, 7
        %v1133 = vsub.s32 0, %v1132
        %v1134 = vrot.slane %v1129, %v1133
        %v1140 = vunpack.c.l.b16 %v1125
        %v1141 = vunpack.c.l.b16 %v1126
        %v1142 = vunpack.c.l.b16 %v1127
        %v1143 = vunpack.c.l.b16 %v1128
        %v1144 = vpack.c.b16 %v1141, %v1140
        %v1145 = vpack.c.b16 %v1143, %v1142
        %v1149 = vsel %vm577, %v1124, 0
        %1151 = vmatprep.subr.bf16.mxu0 0
        %1152 = vmatpush1.bf16.msra.mxu0 0
        %1153 = vmatprep.subr.bf16.mxu0 0
        %1154 = vmatpush1.bf16.msra.mxu0 0
        %1155 = vmatprep.subr.bf16.mxu0 0
        %1156 = vmatpush1.bf16.msra.mxu0 0
        %1157 = vmatprep.subr.bf16.mxu0 0
        %1158 = vmatpush1.bf16.msra.mxu0 0
        %1159 = vmatprep.subr.bf16.mxu0 0
        %1160 = vmatpush1.bf16.msra.mxu0 0
        %1161 = vmatprep.subr.bf16.mxu0 0
        %1162 = vmatpush1.bf16.msra.mxu0 0
        %1163 = vmatprep.subr.bf16.mxu0 0
        %1164 = vmatpush1.bf16.msra.mxu0 %v1145
        %1165 = vmatprep.subr.bf16.mxu0 0
        %1166 = vmatpush1.bf16.msra.mxu0 %v1144
        %1167 = vmatprep.subr.bf16.mxu0 0
        %1168 = vmatpush2.bf16.msra.mxu0 0
        %1169 = vmatprep.subr.bf16.mxu0 0
        %1170 = vmatpush2.bf16.msra.mxu0 0
        %1171 = vmatprep.subr.bf16.mxu0 0
        %1172 = vmatpush2.bf16.msra.mxu0 0
        %1173 = vmatprep.subr.bf16.mxu0 0
        %1174 = vmatpush2.bf16.msra.mxu0 0
        %1175 = vmatprep.subr.bf16.mxu0 0
        %1176 = vmatpush2.bf16.msra.mxu0 0
        %1177 = vmatprep.subr.bf16.mxu0 0
        %1178 = vmatpush2.bf16.msra.mxu0 0
        %1179 = vmatprep.subr.bf16.mxu0 0
        %1180 = vmatpush2.bf16.msra.mxu0 0
        %1181 = vmatprep.subr.bf16.mxu0 0
        %1182 = vmatpush2.bf16.msra.mxu0 0
        %1183 = vmatprep.mubr.bf16.mxu0 0
        %1184 = vmatmul.mubr.bf16.gmra.mxu0 %v1149
        %v1185 = vpop.f32.mrf.mxu0
        %v1186 = vadd.f32 %v1134, %v1185
        %v1187 = vpop.f32.mrf.mxu0
        %v1188 = vpop.f32.mrf.mxu0
        %v1189 = vpop.f32.mrf.mxu0
        %1190 = vdwg.mxu0
        %v1191 = vmax.f32 %v1186, 0.0
        %v1192 = vpack.c.bf16 %v1191, %v1191
        %v1193 = vld [vmem:[%s14] sm:$0xf]
        %v1194 = vld [vmem:[%s14 + $0x4] sm:$0xf]
        %v1195 = vld [vmem:[%s14 + $0x8] sm:$0xf]
        %v1196 = vld [vmem:[%s14 + $0xc] sm:$0xf]
        %v1197 = vld [vmem:[%s14 + $0x10] sm:$0xf]
        %v1198 = vld [vmem:[%s14 + $0x14] sm:$0xf]
        %v1199 = vld [vmem:[%s14 + $0x18] sm:$0xf]
        %v1200 = vld [vmem:[%s14 + $0x1c] sm:$0xf]
        %v1201 = vld [vmem:[%s15] sm:$0x1]
        %v1203 = vlaneseq
        %v1204 = vshrl.u32 %v1203, 7
        %v1205 = vsub.s32 0, %v1204
        %v1206 = vrot.slane %v1201, %v1205
        %v1216 = vunpack.c.l.b16 %v1193
        %v1217 = vunpack.c.l.b16 %v1194
        %v1218 = vunpack.c.l.b16 %v1195
        %v1219 = vunpack.c.l.b16 %v1196
        %v1220 = vunpack.c.l.b16 %v1197
        %v1221 = vunpack.c.l.b16 %v1198
        %v1222 = vunpack.c.l.b16 %v1199
        %v1223 = vunpack.c.l.b16 %v1200
        %v1224 = vpack.c.b16 %v1217, %v1216
        %v1225 = vpack.c.b16 %v1219, %v1218
        %v1226 = vpack.c.b16 %v1221, %v1220
        %v1227 = vpack.c.b16 %v1223, %v1222
        %vm1232 = vcmask 523264
        %v1234 = vsel %vm1232, %v1192, 0
        %1236 = vmatprep.subr.bf16.mxu0 0
        %1237 = vmatpush1.bf16.msra.mxu0 0
        %1238 = vmatprep.subr.bf16.mxu0 0
        %1239 = vmatpush1.bf16.msra.mxu0 0
        %1240 = vmatprep.subr.bf16.mxu0 0
        %1241 = vmatpush1.bf16.msra.mxu0 0
        %1242 = vmatprep.subr.bf16.mxu0 0
        %1243 = vmatpush1.bf16.msra.mxu0 0
        %1244 = vmatprep.subr.bf16.mxu0 0
        %1245 = vmatpush1.bf16.msra.mxu0 %v1227
        %1246 = vmatprep.subr.bf16.mxu0 0
        %1247 = vmatpush1.bf16.msra.mxu0 %v1226
        %1248 = vmatprep.subr.bf16.mxu0 0
        %1249 = vmatpush1.bf16.msra.mxu0 %v1225
        %1250 = vmatprep.subr.bf16.mxu0 0
        %1251 = vmatpush1.bf16.msra.mxu0 %v1224
        %1252 = vmatprep.subr.bf16.mxu0 0
        %1253 = vmatpush2.bf16.msra.mxu0 0
        %1254 = vmatprep.subr.bf16.mxu0 0
        %1255 = vmatpush2.bf16.msra.mxu0 0
        %1256 = vmatprep.subr.bf16.mxu0 0
        %1257 = vmatpush2.bf16.msra.mxu0 0
        %1258 = vmatprep.subr.bf16.mxu0 0
        %1259 = vmatpush2.bf16.msra.mxu0 0
        %1260 = vmatprep.subr.bf16.mxu0 0
        %1261 = vmatpush2.bf16.msra.mxu0 0
        %1262 = vmatprep.subr.bf16.mxu0 0
        %1263 = vmatpush2.bf16.msra.mxu0 0
        %1264 = vmatprep.subr.bf16.mxu0 0
        %1265 = vmatpush2.bf16.msra.mxu0 0
        %1266 = vmatprep.subr.bf16.mxu0 0
        %1267 = vmatpush2.bf16.msra.mxu0 0
        %1268 = vmatprep.mubr.bf16.mxu0 0
        %1269 = vmatmul.mubr.bf16.gmra.mxu0 %v1234
        %v1270 = vpop.f32.mrf.mxu0
        %v1271 = vadd.f32 %v1206, %v1270
        %v1272 = vpop.f32.mrf.mxu0
        %v1273 = vpop.f32.mrf.mxu0
        %v1274 = vpop.f32.mrf.mxu0
        %1275 = vdwg.mxu0
        %v1276 = vadd.f32 %v1271, %v1123
        %v1277 = vld [vmem:[%s16] sm:$0x1]
        %v1278 = vld [vmem:[%s17] sm:$0x1]
        %v1279 = vsel %vm577, %v1276, 0.0
        %1280 = vadd.xlane.f32.xlu0 %v1279
        %v1281 = vpop.xlane.xlu0 %1280
        %v1282 = vmul.f32 %v1281, %v1099
        %v1283 = vsub.f32 %v1276, %v1282
        %v1284 = vmul.f32 %v1283, %v1283
        %v1285 = vsel %vm577, %v1284, 0.0
        %1286 = vadd.xlane.f32.xlu0 %v1285
        %v1287 = vpop.xlane.xlu0 %1286
        %v1288 = vmul.f32 %v1287, %v1099
        %v1289 = vadd.f32 %v1288, 1e-05
        %v1290 = vrsqrt.pop %v1289
        %v1291 = vmul.f32 %v1283, %v1290
        %v1293 = vlaneseq
        %v1294 = vshrl.u32 %v1293, 7
        %v1295 = vsub.s32 0, %v1294
        %v1296 = vrot.slane %v1277, %v1295
        %v1298 = vmul.f32 %v1291, %v1296
        %v1300 = vlaneseq
        %v1301 = vshrl.u32 %v1300, 7
        %v1302 = vsub.s32 0, %v1301
        %v1303 = vrot.slane %v1278, %v1302
        %v1305 = vadd.f32 %v1298, %v1303
        %1306 = vst.msk [vmem:[%s546] sm:$0xff] %vm577, %v1305
        %s1307 = sand.u32 %s408, 1
        %s1308 = scalar_lea.sflag [#allocation5], %s1307
        %s1309 = sand.u32 %s408, 1
        %s1310 = smul.addr %s1309, 8
        %s1311 = scalar_lea.vmem [#allocation4], %s1310
        // Predicated region
        $region89: #{encoder_layer.1} parent=87 // pred_check
          %p1312 = pneg %p418
        $region90: #{encoder_layer.1} parent=87 // pred_check_branch
          %1314 = sbr.rel (%p1312) target = $region92
        $region91: #{encoder_layer.1} parent=87 // pred_region
          %s1316 = ssub.s32 128, 128
          %1317 = vsyncadd %s1308, %s1316
          %s1318 = smul.addr %s38, 128
          %s1319 = scalar_lea.hbm %s18, %s1318
          %s1321 = sshll.u32 %s1311, 4
          %s1322 = int_to_ptr.vmem [resolvable:$true] %s1321
          %1324 = dma.vmem_to_hbm [thread:$0]  %s1322, 128, %s1319, %s1308
        $region92: #{encoder_layer.1} parent=87 // pred_fallthru
          _
      $region88: #{encoder_layer.1} parent=5 // pred_fallthru
        _
      %p1325 = scmp.le.s32.totalorder 2, %s33
      // Predicated region
      $region93: #{encoder_layer.1} parent=5 // pred_check
        %p1326 = pneg %p1325
      $region94: #{encoder_layer.1} parent=5 // pred_check_branch
        %1328 = sbr.rel (%p1326) target = $region96
      $region95: #{encoder_layer.1} parent=5 // pred_region
        %s1329 = ssub.s32 %s33, 2
        // Predicated region
        $region97: #{encoder_layer.1} parent=95 // pred_check
          %p1330 = pneg %p424
        $region98: #{encoder_layer.1} parent=95 // pred_check_branch
          %1332 = sbr.rel (%p1330) target = $region100
        $region99: #{encoder_layer.1} parent=95 // pred_region
          %s1333 = sand.u32 %s409, 1
          %s1334 = scalar_lea.sflag [#allocation5], %s1333
          %s1335 = sand.u32 %s409, 1
          %s1336 = smul.addr %s1335, 8
          %s1337 = scalar_lea.vmem [#allocation4], %s1336
          %1338 = dma.done %s1334, 128
        $region100: #{encoder_layer.1} parent=95 // pred_fallthru
          _
      $region96: #{encoder_layer.1} parent=5 // pred_fallthru
        _
    $region6: #{encoder_layer.1} parent=1 // loop_footer
      %s37 = sadd.s32 1, %s33
    $region7: #{encoder_layer.1} parent=1 // loop_footer_branch
      %32 = sbr.rel target = $region3
    $region8: #{encoder_layer.1} parent=1 // loop_exit
      _
    %1339 = vsyncpa [#allocation5], 1
    %s1340 = scalar_lea.sflag [#allocation5], 1
    %1341 = vsyncpa %s1340, 1

</llo_original>
